<compile_context>
chip_gen: v6e
topology: v6e:2x2x1
jax: 0.10.0
libtpu: 0.0.40
codegen_flags: <defaults>
</compile_context>

<pallas_src>
import math

import jax
import jax.numpy as jnp
from jax.experimental import pallas as pl
from jax.experimental.pallas import tpu as pltpu

# ---- model hyper-parameters (small, consistent with the module) ----
D_MODEL = 32
NHEAD = 4
DIM_FF = 64
NUM_LAYERS = 2
SEQ = 8
BATCH = 2

# The module builds `ZenLayerNorm(d_model)` and ZenLayerNorm.__init__ only takes
# `eps` -- so d_model is used as eps.  Replicated faithfully (set to 1e-5 if the
# conventional layer-norm eps is intended).
LN_EPS = float(D_MODEL)


def _make_stack_kernel(nhead: int, batch: int):
    """One grid step == one TransformerEncoderLayer forward."""

    def kernel(x_ref, wqkv_ref, bqkv_ref, wo_ref, bo_ref,
               w1_ref, b1_ref, w2_ref, b2_ref,
               out_ref, sigma_ref, act_ref):
        l = pl.program_id(0)

        # Layer 0 consumes the (wrapper-flattened) input; later layers consume the
        # activation left resident in VMEM scratch by the previous grid step.
        @pl.when(l == 0)
        def _():
            act_ref[...] = x_ref[...]

        x = act_ref[...]                                   # (SB, D) f32
        SB, D = x.shape
        dh = D // nhead

        # Block-diagonal additive attention bias built in-kernel (2 iota vregs):
        # rows are s*B + b; two rows attend iff they belong to the same batch elem.
        ri = jax.lax.broadcasted_iota(jnp.int32, (SB, SB), 0)
        ci = jax.lax.broadcasted_iota(jnp.int32, (SB, SB), 1)
        bias = jnp.where((ri % batch) == (ci % batch), 0.0, -1e30)   # (SB,SB) f32

        # ---- fused QKV projection (bf16 MXU operands, f32 accumulation) ----
        # Q-scale (1/sqrt(dh)) is already folded into wqkv/bqkv.
        x_bf = x.astype(jnp.bfloat16)
        qkv = jnp.dot(x_bf, wqkv_ref[...],
                      preferred_element_type=jnp.float32) + bqkv_ref[...]
        qkv_bf = qkv.astype(jnp.bfloat16)                  # (SB, 3D) bf16

        # ---- multi-head attention via static lane slices (no 3D/4D reshapes) ----
        heads = []
        for h in range(nhead):                             # static unroll, tiny
            q_h = qkv_bf[:, h * dh:(h + 1) * dh]
            k_h = qkv_bf[:, D + h * dh:D + (h + 1) * dh]
            v_h = qkv_bf[:, 2 * D + h * dh:2 * D + (h + 1) * dh]
            s = jax.lax.dot_general(q_h, k_h, (((1,), (1,)), ((), ())),
                                    preferred_element_type=jnp.float32) + bias
            s = s - jnp.max(s, axis=-1, keepdims=True)
            p = jnp.exp(s)                                 # f32 EUP
            p = p * pl.reciprocal(jnp.sum(p, axis=-1, keepdims=True), approx=True)
            heads.append(jnp.dot(p.astype(jnp.bfloat16), v_h,
                                 preferred_element_type=jnp.float32))   # (SB, dh)

        # Single output projection on the lane-concatenated heads (== concat+matmul).
        o = jnp.concatenate(heads, axis=-1)                # (SB, D) f32
        attn = jnp.dot(o.astype(jnp.bfloat16), wo_ref[...],
                       preferred_element_type=jnp.float32) + bo_ref[...]

        # ---- residual + ZenLayerNorm (no affine params; sigma = per-token var) ----
        r = x + attn
        mu = jnp.mean(r, axis=-1, keepdims=True)
        var = jnp.mean((r - mu) ** 2, axis=-1, keepdims=True)          # (SB, 1)
        y = (r - mu) * jax.lax.rsqrt(var + LN_EPS)

        # ---- FFN: linear2(relu(linear1(y))) -- no second residual / norm2 ----
        hdn = jnp.maximum(
            jnp.dot(y.astype(jnp.bfloat16), w1_ref[...],
                    preferred_element_type=jnp.float32) + b1_ref[...], 0.0)
        z = jnp.dot(hdn.astype(jnp.bfloat16), w2_ref[...],
                    preferred_element_type=jnp.float32) + b2_ref[...]

        act_ref[...] = z                                   # carry to next layer

        # Lane-dense sigma write: turn the (SB,1) column into a (1,SB) row via
        # select + sublane-sum (no reshape/transpose lowering needed).
        eye = ri == ci
        sigma_ref[...] = jnp.sum(jnp.where(eye, var, 0.0), axis=0, keepdims=True)

        # Only the last layer's result leaves VMEM.
        @pl.when(l == pl.num_programs(0) - 1)
        def _():
            out_ref[...] = z.astype(out_ref.dtype)

    return kernel


def transformer_encoder_layers(src, params):
    """Applies NUM_LAYERS stacked encoder-layer forwards in one fused pallas_call.

    Args:
      src: (S, B, D) float32, seq-first like nn.Transformer.
      params: dict of layer-stacked weights (leading dim = NUM_LAYERS), linear
        weights pre-transposed to (in_features, out_features), stored bf16, with
        the 1/sqrt(d_head) scale already folded into the Q columns (fold_q_scale).
    Returns:
      (output (S, B, D) float32, sigmas (NUM_LAYERS, S*B) float32)
    """
    S, B, D = src.shape
    L, _, threeD = params['wqkv'].shape
    F = params['w1'].shape[-1]
    SB = S * B

    # Flatten in the wrapper (free) so the kernel never reshapes (S,B,D).
    xf = src.reshape(SB, D).astype(jnp.float32)

    def wspec(d1, d2):
        return pl.BlockSpec((None, d1, d2), lambda l: (l, 0, 0))

    kernel = _make_stack_kernel(NHEAD, B)
    out_flat, sigma = pl.pallas_call(
        kernel,
        out_shape=(jax.ShapeDtypeStruct((SB, D), jnp.float32),
                   jax.ShapeDtypeStruct((L, 1, SB), jnp.float32)),
        grid_spec=pltpu.PrefetchScalarGridSpec(
            num_scalar_prefetch=0,
            grid=(L,),
            in_specs=[
                pl.BlockSpec((SB, D), lambda l: (0, 0)),     # x (used at l == 0)
                wspec(D, threeD),                            # wqkv (bf16, Q-scaled)
                wspec(1, threeD),                            # bqkv (f32, Q-scaled)
                wspec(D, D),                                 # wo   (bf16)
                wspec(1, D),                                 # bo   (f32)
                wspec(D, F),                                 # w1   (bf16)
                wspec(1, F),                                 # b1   (f32)
                wspec(F, D),                                 # w2   (bf16)
                wspec(1, D),                                 # b2   (f32)
            ],
            out_specs=(
                pl.BlockSpec((SB, D), lambda l: (0, 0)),       # VMEM-resident output
                pl.BlockSpec((None, 1, SB), lambda l: (l, 0, 0)),  # lane-dense sigma
            ),
            scratch_shapes=[pltpu.VMEM((SB, D), jnp.float32)],
        ),
        compiler_params=pltpu.CompilerParams(
            dimension_semantics=("arbitrary",)),
    )(xf, params['wqkv'], params['bqkv'], params['wo'], params['bo'],
      params['w1'], params['b1'], params['w2'], params['b2'])

    return out_flat.reshape(S, B, D), sigma[:, 0, :]


def reference_forward(src, params):
    """Pure-JAX reference (head-reshape / einsum formulation), natural params."""
    S, B, D = src.shape
    H, dh = NHEAD, D // NHEAD
    L = params['wqkv'].shape[0]
    x = src.reshape(S * B, D).astype(jnp.float32)
    sigmas = []
    for l in range(L):
        wqkv = params['wqkv'][l].astype(jnp.float32)
        wo = params['wo'][l].astype(jnp.float32)
        w1 = params['w1'][l].astype(jnp.float32)
        w2 = params['w2'][l].astype(jnp.float32)
        bqkv, bo = params['bqkv'][l], params['bo'][l]
        b1, b2 = params['b1'][l], params['b2'][l]

        qkv = x @ wqkv + bqkv
        q = qkv[:, :D] / math.sqrt(dh)
        k = qkv[:, D:2 * D]
        v = qkv[:, 2 * D:]
        q4 = q.reshape(S, B, H, dh)
        k4 = k.reshape(S, B, H, dh)
        v4 = v.reshape(S, B, H, dh)
        s = jnp.einsum('sbhd,tbhd->bhst', q4, k4)
        p = jax.nn.softmax(s, axis=-1)
        o = jnp.einsum('bhst,tbhd->sbhd', p, v4).reshape(S * B, D)
        attn = o @ wo + bo

        r = x + attn
        mu = r.mean(-1, keepdims=True)
        var = ((r - mu) ** 2).mean(-1, keepdims=True)
        y = (r - mu) / jnp.sqrt(var + LN_EPS)

        z = jnp.maximum(y @ w1 + b1, 0.0) @ w2 + b2
        sigmas.append(var[:, 0])
        x = z
    return x.reshape(S, B, D), jnp.stack(sigmas)


def init_params(key, num_layers, d_model, dim_ff):
    """Layer-stacked natural parameters; weights bf16, biases f32 (unscaled Q)."""
    ks = jax.random.split(key, 8)
    L = num_layers

    def w(k, shape, scale=0.2):
        return (scale * jax.random.normal(k, shape, jnp.float32)).astype(jnp.bfloat16)

    def b(k, shape, scale=0.1):
        return scale * jax.random.normal(k, shape, jnp.float32)

    return {
        'wqkv': w(ks[0], (L, d_model, 3 * d_model)),
        'bqkv': b(ks[1], (L, 1, 3 * d_model)),
        'wo':   w(ks[2], (L, d_model, d_model)),
        'bo':   b(ks[3], (L, 1, d_model)),
        'w1':   w(ks[4], (L, d_model, dim_ff)),
        'b1':   b(ks[5], (L, 1, dim_ff)),
        'w2':   w(ks[6], (L, dim_ff, d_model)),
        'b2':   b(ks[7], (L, 1, d_model)),
    }


def fold_q_scale(params, nhead):
    """One-time parameter transform: fold 1/sqrt(d_head) into the Q columns."""
    d = params['wqkv'].shape[1]
    dh = d // nhead
    scale = 1.0 / math.sqrt(dh)
    col_scale = jnp.concatenate(
        [jnp.full((d,), scale, jnp.float32), jnp.ones((2 * d,), jnp.float32)])
    p = dict(params)
    p['wqkv'] = (params['wqkv'].astype(jnp.float32) * col_scale).astype(jnp.bfloat16)
    p['bqkv'] = params['bqkv'] * col_scale
    return p


if __name__ == "__main__":
    key = jax.random.PRNGKey(0)
    k_src, k_par = jax.random.split(key)

    src = jax.random.normal(k_src, (SEQ, BATCH, D_MODEL), jnp.float32)
    params = init_params(k_par, NUM_LAYERS, D_MODEL, DIM_FF)   # natural params
    kparams = fold_q_scale(params, NHEAD)                      # kernel params

    out, sigmas = transformer_encoder_layers(src, kparams)
    jax.block_until_ready(out)
    jax.block_until_ready(sigmas)

    ref_out, ref_sig = reference_forward(src, params)

    assert out.shape == (SEQ, BATCH, D_MODEL)
    assert sigmas.shape == (NUM_LAYERS, SEQ * BATCH)
    assert bool(jnp.all(jnp.isfinite(out))) and bool(jnp.all(jnp.isfinite(sigmas)))

    # bf16 MXU operands + approx reciprocal -> loose (but meaningful) tolerances.
    tol_o = 2e-2 + 4e-2 * float(jnp.max(jnp.abs(ref_out)))
    tol_s = 2e-2 + 4e-2 * float(jnp.max(jnp.abs(ref_sig)))
    err_o = float(jnp.max(jnp.abs(out - ref_out)))
    err_s = float(jnp.max(jnp.abs(sigmas - ref_sig)))
    assert err_o < tol_o, f"output mismatch: {err_o} >= {tol_o}"
    assert err_s < tol_s, f"sigma mismatch: {err_s} >= {tol_s}"

    print("KERNEL_OK")
</pallas_src>

<mosaic_0001>
module attributes {stable_mosaic.version = 11 : i64} {
  func.func @kernel(%arg0: i32, %arg1: memref<16x32xf32, #tpu.memory_space<vmem>>, %arg2: memref<1x32x96xbf16, #tpu.memory_space<vmem>>, %arg3: memref<1x1x96xf32, #tpu.memory_space<vmem>>, %arg4: memref<1x32x32xbf16, #tpu.memory_space<vmem>>, %arg5: memref<1x1x32xf32, #tpu.memory_space<vmem>>, %arg6: memref<1x32x64xbf16, #tpu.memory_space<vmem>>, %arg7: memref<1x1x64xf32, #tpu.memory_space<vmem>>, %arg8: memref<1x64x32xbf16, #tpu.memory_space<vmem>>, %arg9: memref<1x1x32xf32, #tpu.memory_space<vmem>>, %arg10: memref<16x32xf32, #tpu.memory_space<vmem>>, %arg11: memref<1x1x16xf32, #tpu.memory_space<vmem>>, %arg12: memref<16x32xf32, #tpu.memory_space<vmem>>) attributes {dimension_semantics = [#tpu.dimension_semantics<arbitrary>], iteration_bounds = array<i64: 2>, scalar_prefetch = 0 : i64, scratch_operands = 1 : i64, tpu.core_type = #tpu.core_type<tc>, window_params = [{pipeline_mode = #tpu.pipeline_mode<synchronous>, transform_indices = @transform_0, window_bounds = array<i64: 16, 32>}, {transform_indices = @transform_1, window_bounds = array<i64: 1, 32, 96>}, {transform_indices = @transform_2, window_bounds = array<i64: 1, 1, 96>}, {transform_indices = @transform_3, window_bounds = array<i64: 1, 32, 32>}, {transform_indices = @transform_4, window_bounds = array<i64: 1, 1, 32>}, {transform_indices = @transform_5, window_bounds = array<i64: 1, 32, 64>}, {transform_indices = @transform_6, window_bounds = array<i64: 1, 1, 64>}, {transform_indices = @transform_7, window_bounds = array<i64: 1, 64, 32>}, {transform_indices = @transform_8, window_bounds = array<i64: 1, 1, 32>}, {pipeline_mode = #tpu.pipeline_mode<synchronous>, transform_indices = @transform_9, window_bounds = array<i64: 16, 32>}, {transform_indices = @transform_10, window_bounds = array<i64: 1, 1, 16>}]} {
    %c0_i32 = arith.constant 0 : i32
    %0 = arith.cmpi eq, %arg0, %c0_i32 : i32
    %1 = arith.extui %0 : i1 to i32
    %c0_i32_0 = arith.constant 0 : i32
    %2 = arith.cmpi ne, %1, %c0_i32_0 : i32
    scf.if %2 {
      %c0_72 = arith.constant 0 : index
      %c0_73 = arith.constant 0 : index
      %179 = vector.load %arg1[%c0_72, %c0_73] : memref<16x32xf32, #tpu.memory_space<vmem>>, vector<16x32xf32>
      %c0_74 = arith.constant 0 : index
      %c0_75 = arith.constant 0 : index
      %180 = vector.load %arg12[%c0_74, %c0_75] : memref<16x32xf32, #tpu.memory_space<vmem>>, vector<16x32xf32>
      tpu.vector_store %arg12[%c0_74, %c0_75], %179 {strides = array<i32>} : memref<16x32xf32, #tpu.memory_space<vmem>>, vector<16x32xf32>,
    } else {
    }
    %c0 = arith.constant 0 : index
    %c0_1 = arith.constant 0 : index
    %3 = vector.load %arg12[%c0, %c0_1] : memref<16x32xf32, #tpu.memory_space<vmem>>, vector<16x32xf32>
    %4 = tpu.iota {dimensions = array<i32: 0>} : vector<16x16xi32>
    %5 = tpu.iota {dimensions = array<i32: 1>} : vector<16x16xi32>
    %c2_i32 = arith.constant 2 : i32
    %c0_i32_2 = arith.constant 0 : i32
    %6 = arith.cmpi eq, %c2_i32, %c0_i32_2 : i32
    %c1_i32 = arith.constant 1 : i32
    %7 = arith.select %6, %c1_i32, %c2_i32 : i32
    %8 = vector.broadcast %7 : i32 to vector<16x16xi32>
    %9 = arith.remsi %4, %8 : vector<16x16xi32>
    %c0_i32_3 = arith.constant 0 : i32
    %10 = vector.broadcast %c0_i32_3 : i32 to vector<16x16xi32>
    %11 = arith.cmpi ne, %9, %10 : vector<16x16xi32>
    %c0_i32_4 = arith.constant 0 : i32
    %12 = vector.broadcast %c0_i32_4 : i32 to vector<16x16xi32>
    %13 = arith.cmpi slt, %9, %12 : vector<16x16xi32>
    %c0_i32_5 = arith.constant 0 : i32
    %14 = arith.cmpi slt, %7, %c0_i32_5 : i32
    %15 = vector.broadcast %14 : i1 to vector<16x16xi1>
    %16 = vector.broadcast %15 : vector<16x16xi1> to vector<16x16xi1>
    %17 = arith.xori %13, %16 : vector<16x16xi1>
    %18 = arith.andi %17, %11 : vector<16x16xi1>
    %19 = vector.broadcast %7 : i32 to vector<16x16xi32>
    %20 = arith.addi %9, %19 : vector<16x16xi32>
    %21 = arith.select %18, %20, %9 : vector<16x16xi1>, vector<16x16xi32>
    %c2_i32_6 = arith.constant 2 : i32
    %c0_i32_7 = arith.constant 0 : i32
    %22 = arith.cmpi eq, %c2_i32_6, %c0_i32_7 : i32
    %c1_i32_8 = arith.constant 1 : i32
    %23 = arith.select %22, %c1_i32_8, %c2_i32_6 : i32
    %24 = vector.broadcast %23 : i32 to vector<16x16xi32>
    %25 = arith.remsi %5, %24 : vector<16x16xi32>
    %c0_i32_9 = arith.constant 0 : i32
    %26 = vector.broadcast %c0_i32_9 : i32 to vector<16x16xi32>
    %27 = arith.cmpi ne, %25, %26 : vector<16x16xi32>
    %c0_i32_10 = arith.constant 0 : i32
    %28 = vector.broadcast %c0_i32_10 : i32 to vector<16x16xi32>
    %29 = arith.cmpi slt, %25, %28 : vector<16x16xi32>
    %c0_i32_11 = arith.constant 0 : i32
    %30 = arith.cmpi slt, %23, %c0_i32_11 : i32
    %31 = vector.broadcast %30 : i1 to vector<16x16xi1>
    %32 = vector.broadcast %31 : vector<16x16xi1> to vector<16x16xi1>
    %33 = arith.xori %29, %32 : vector<16x16xi1>
    %34 = arith.andi %33, %27 : vector<16x16xi1>
    %35 = vector.broadcast %23 : i32 to vector<16x16xi32>
    %36 = arith.addi %25, %35 : vector<16x16xi32>
    %37 = arith.select %34, %36, %25 : vector<16x16xi1>, vector<16x16xi32>
    %38 = arith.cmpi eq, %21, %37 : vector<16x16xi32>
    %cst = arith.constant 0.000000e+00 : f32
    %cst_12 = arith.constant -1.000000e+30 : f32
    %39 = vector.broadcast %cst : f32 to vector<16x16xf32>
    %40 = vector.broadcast %cst_12 : f32 to vector<16x16xf32>
    %41 = arith.select %38, %39, %40 : vector<16x16xi1>, vector<16x16xf32>
    %42 = arith.truncf %3 : vector<16x32xf32> to vector<16x32xbf16>
    %c0_13 = arith.constant 0 : index
    %c0_14 = arith.constant 0 : index
    %c0_15 = arith.constant 0 : index
    %43 = vector.load %arg2[%c0_13, %c0_14, %c0_15] : memref<1x32x96xbf16, #tpu.memory_space<vmem>>, vector<1x32x96xbf16>
    %44 = vector.shape_cast %43 : vector<1x32x96xbf16> to vector<32x96xbf16>
    %cst_16 = arith.constant dense<0.000000e+00> : vector<16x96xf32>
    %45 = tpu.matmul %42, %44, %cst_16 {dimension_numbers = #tpu.dot_dimension_numbers<[1], [0], [0], [1], [0, 0, 1, 1], [], []>} : vector<16x32xbf16>, vector<32x96xbf16>, vector<16x96xf32> -> vector<16x96xf32>
    %c0_17 = arith.constant 0 : index
    %c0_18 = arith.constant 0 : index
    %c0_19 = arith.constant 0 : index
    %46 = vector.load %arg3[%c0_17, %c0_18, %c0_19] : memref<1x1x96xf32, #tpu.memory_space<vmem>>, vector<1x1x96xf32>
    %47 = vector.shape_cast %46 : vector<1x1x96xf32> to vector<1x96xf32>
    %48 = vector.broadcast %47 : vector<1x96xf32> to vector<16x96xf32>
    %49 = arith.addf %45, %48 : vector<16x96xf32>
    %50 = arith.truncf %49 : vector<16x96xf32> to vector<16x96xbf16>
    %51 = vector.extract_strided_slice %50 {offsets = [0, 0], sizes = [16, 8], strides = [1, 1]} : vector<16x96xbf16> to vector<16x8xbf16>
    %52 = vector.extract_strided_slice %50 {offsets = [0, 32], sizes = [16, 8], strides = [1, 1]} : vector<16x96xbf16> to vector<16x8xbf16>
    %53 = vector.extract_strided_slice %50 {offsets = [0, 64], sizes = [16, 8], strides = [1, 1]} : vector<16x96xbf16> to vector<16x8xbf16>
    %cst_20 = arith.constant dense<0.000000e+00> : vector<16x16xf32>
    %54 = tpu.matmul %51, %52, %cst_20 {dimension_numbers = #tpu.dot_dimension_numbers<[1], [1], [0], [0], [0, 0, 1, 0], [], []>} : vector<16x8xbf16>, vector<16x8xbf16>, vector<16x16xf32> -> vector<16x16xf32>
    %55 = arith.addf %54, %41 : vector<16x16xf32>
    %cst_21 = arith.constant dense<0xFF800000> : vector<16xf32>
    %56 = vector.multi_reduction <maximumf>, %55, %cst_21 [1] : vector<16x16xf32> to vector<16xf32>
    %57 = vector.shape_cast %56 : vector<16xf32> to vector<16x1xf32>
    %58 = vector.broadcast %57 : vector<16x1xf32> to vector<16x16xf32>
    %59 = arith.subf %55, %58 : vector<16x16xf32>
    %60 = math.exp %59 : vector<16x16xf32>
    %cst_22 = arith.constant dense<0.000000e+00> : vector<16xf32>
    %61 = vector.multi_reduction <add>, %60, %cst_22 [1] : vector<16x16xf32> to vector<16xf32>
    %62 = vector.shape_cast %61 : vector<16xf32> to vector<16x1xf32>
    %63 = tpu.reciprocal %62 {approx = true} : vector<16x1xf32> -> vector<16x1xf32>
    %64 = vector.broadcast %63 : vector<16x1xf32> to vector<16x16xf32>
    %65 = arith.mulf %60, %64 : vector<16x16xf32>
    %66 = arith.truncf %65 : vector<16x16xf32> to vector<16x16xbf16>
    %cst_23 = arith.constant dense<0.000000e+00> : vector<16x8xf32>
    %67 = tpu.matmul %66, %53, %cst_23 {dimension_numbers = #tpu.dot_dimension_numbers<[1], [0], [0], [1], [0, 0, 1, 1], [], []>} : vector<16x16xbf16>, vector<16x8xbf16>, vector<16x8xf32> -> vector<16x8xf32>
    %68 = vector.extract_strided_slice %50 {offsets = [0, 8], sizes = [16, 8], strides = [1, 1]} : vector<16x96xbf16> to vector<16x8xbf16>
    %69 = vector.extract_strided_slice %50 {offsets = [0, 40], sizes = [16, 8], strides = [1, 1]} : vector<16x96xbf16> to vector<16x8xbf16>
    %70 = vector.extract_strided_slice %50 {offsets = [0, 72], sizes = [16, 8], strides = [1, 1]} : vector<16x96xbf16> to vector<16x8xbf16>
    %cst_24 = arith.constant dense<0.000000e+00> : vector<16x16xf32>
    %71 = tpu.matmul %68, %69, %cst_24 {dimension_numbers = #tpu.dot_dimension_numbers<[1], [1], [0], [0], [0, 0, 1, 0], [], []>} : vector<16x8xbf16>, vector<16x8xbf16>, vector<16x16xf32> -> vector<16x16xf32>
    %72 = arith.addf %71, %41 : vector<16x16xf32>
    %cst_25 = arith.constant dense<0xFF800000> : vector<16xf32>
    %73 = vector.multi_reduction <maximumf>, %72, %cst_25 [1] : vector<16x16xf32> to vector<16xf32>
    %74 = vector.shape_cast %73 : vector<16xf32> to vector<16x1xf32>
    %75 = vector.broadcast %74 : vector<16x1xf32> to vector<16x16xf32>
    %76 = arith.subf %72, %75 : vector<16x16xf32>
    %77 = math.exp %76 : vector<16x16xf32>
    %cst_26 = arith.constant dense<0.000000e+00> : vector<16xf32>
    %78 = vector.multi_reduction <add>, %77, %cst_26 [1] : vector<16x16xf32> to vector<16xf32>
    %79 = vector.shape_cast %78 : vector<16xf32> to vector<16x1xf32>
    %80 = tpu.reciprocal %79 {approx = true} : vector<16x1xf32> -> vector<16x1xf32>
    %81 = vector.broadcast %80 : vector<16x1xf32> to vector<16x16xf32>
    %82 = arith.mulf %77, %81 : vector<16x16xf32>
    %83 = arith.truncf %82 : vector<16x16xf32> to vector<16x16xbf16>
    %cst_27 = arith.constant dense<0.000000e+00> : vector<16x8xf32>
    %84 = tpu.matmul %83, %70, %cst_27 {dimension_numbers = #tpu.dot_dimension_numbers<[1], [0], [0], [1], [0, 0, 1, 1], [], []>} : vector<16x16xbf16>, vector<16x8xbf16>, vector<16x8xf32> -> vector<16x8xf32>
    %85 = vector.extract_strided_slice %50 {offsets = [0, 16], sizes = [16, 8], strides = [1, 1]} : vector<16x96xbf16> to vector<16x8xbf16>
    %86 = vector.extract_strided_slice %50 {offsets = [0, 48], sizes = [16, 8], strides = [1, 1]} : vector<16x96xbf16> to vector<16x8xbf16>
    %87 = vector.extract_strided_slice %50 {offsets = [0, 80], sizes = [16, 8], strides = [1, 1]} : vector<16x96xbf16> to vector<16x8xbf16>
    %cst_28 = arith.constant dense<0.000000e+00> : vector<16x16xf32>
    %88 = tpu.matmul %85, %86, %cst_28 {dimension_numbers = #tpu.dot_dimension_numbers<[1], [1], [0], [0], [0, 0, 1, 0], [], []>} : vector<16x8xbf16>, vector<16x8xbf16>, vector<16x16xf32> -> vector<16x16xf32>
    %89 = arith.addf %88, %41 : vector<16x16xf32>
    %cst_29 = arith.constant dense<0xFF800000> : vector<16xf32>
    %90 = vector.multi_reduction <maximumf>, %89, %cst_29 [1] : vector<16x16xf32> to vector<16xf32>
    %91 = vector.shape_cast %90 : vector<16xf32> to vector<16x1xf32>
    %92 = vector.broadcast %91 : vector<16x1xf32> to vector<16x16xf32>
    %93 = arith.subf %89, %92 : vector<16x16xf32>
    %94 = math.exp %93 : vector<16x16xf32>
    %cst_30 = arith.constant dense<0.000000e+00> : vector<16xf32>
    %95 = vector.multi_reduction <add>, %94, %cst_30 [1] : vector<16x16xf32> to vector<16xf32>
    %96 = vector.shape_cast %95 : vector<16xf32> to vector<16x1xf32>
    %97 = tpu.reciprocal %96 {approx = true} : vector<16x1xf32> -> vector<16x1xf32>
    %98 = vector.broadcast %97 : vector<16x1xf32> to vector<16x16xf32>
    %99 = arith.mulf %94, %98 : vector<16x16xf32>
    %100 = arith.truncf %99 : vector<16x16xf32> to vector<16x16xbf16>
    %cst_31 = arith.constant dense<0.000000e+00> : vector<16x8xf32>
    %101 = tpu.matmul %100, %87, %cst_31 {dimension_numbers = #tpu.dot_dimension_numbers<[1], [0], [0], [1], [0, 0, 1, 1], [], []>} : vector<16x16xbf16>, vector<16x8xbf16>, vector<16x8xf32> -> vector<16x8xf32>
    %102 = vector.extract_strided_slice %50 {offsets = [0, 24], sizes = [16, 8], strides = [1, 1]} : vector<16x96xbf16> to vector<16x8xbf16>
    %103 = vector.extract_strided_slice %50 {offsets = [0, 56], sizes = [16, 8], strides = [1, 1]} : vector<16x96xbf16> to vector<16x8xbf16>
    %104 = vector.extract_strided_slice %50 {offsets = [0, 88], sizes = [16, 8], strides = [1, 1]} : vector<16x96xbf16> to vector<16x8xbf16>
    %cst_32 = arith.constant dense<0.000000e+00> : vector<16x16xf32>
    %105 = tpu.matmul %102, %103, %cst_32 {dimension_numbers = #tpu.dot_dimension_numbers<[1], [1], [0], [0], [0, 0, 1, 0], [], []>} : vector<16x8xbf16>, vector<16x8xbf16>, vector<16x16xf32> -> vector<16x16xf32>
    %106 = arith.addf %105, %41 : vector<16x16xf32>
    %cst_33 = arith.constant dense<0xFF800000> : vector<16xf32>
    %107 = vector.multi_reduction <maximumf>, %106, %cst_33 [1] : vector<16x16xf32> to vector<16xf32>
    %108 = vector.shape_cast %107 : vector<16xf32> to vector<16x1xf32>
    %109 = vector.broadcast %108 : vector<16x1xf32> to vector<16x16xf32>
    %110 = arith.subf %106, %109 : vector<16x16xf32>
    %111 = math.exp %110 : vector<16x16xf32>
    %cst_34 = arith.constant dense<0.000000e+00> : vector<16xf32>
    %112 = vector.multi_reduction <add>, %111, %cst_34 [1] : vector<16x16xf32> to vector<16xf32>
    %113 = vector.shape_cast %112 : vector<16xf32> to vector<16x1xf32>
    %114 = tpu.reciprocal %113 {approx = true} : vector<16x1xf32> -> vector<16x1xf32>
    %115 = vector.broadcast %114 : vector<16x1xf32> to vector<16x16xf32>
    %116 = arith.mulf %111, %115 : vector<16x16xf32>
    %117 = arith.truncf %116 : vector<16x16xf32> to vector<16x16xbf16>
    %cst_35 = arith.constant dense<0.000000e+00> : vector<16x8xf32>
    %118 = tpu.matmul %117, %104, %cst_35 {dimension_numbers = #tpu.dot_dimension_numbers<[1], [0], [0], [1], [0, 0, 1, 1], [], []>} : vector<16x16xbf16>, vector<16x8xbf16>, vector<16x8xf32> -> vector<16x8xf32>
    %119 = tpu.concatenate %67, %84, %101, %118 in 1 : vector<16x8xf32>, vector<16x8xf32>, vector<16x8xf32>, vector<16x8xf32> -> vector<16x32xf32>
    %120 = arith.truncf %119 : vector<16x32xf32> to vector<16x32xbf16>
    %c0_36 = arith.constant 0 : index
    %c0_37 = arith.constant 0 : index
    %c0_38 = arith.constant 0 : index
    %121 = vector.load %arg4[%c0_36, %c0_37, %c0_38] : memref<1x32x32xbf16, #tpu.memory_space<vmem>>, vector<1x32x32xbf16>
    %122 = vector.shape_cast %121 : vector<1x32x32xbf16> to vector<32x32xbf16>
    %cst_39 = arith.constant dense<0.000000e+00> : vector<16x32xf32>
    %123 = tpu.matmul %120, %122, %cst_39 {dimension_numbers = #tpu.dot_dimension_numbers<[1], [0], [0], [1], [0, 0, 1, 1], [], []>} : vector<16x32xbf16>, vector<32x32xbf16>, vector<16x32xf32> -> vector<16x32xf32>
    %c0_40 = arith.constant 0 : index
    %c0_41 = arith.constant 0 : index
    %c0_42 = arith.constant 0 : index
    %124 = vector.load %arg5[%c0_40, %c0_41, %c0_42] : memref<1x1x32xf32, #tpu.memory_space<vmem>>, vector<1x1x32xf32>
    %125 = vector.shape_cast %124 : vector<1x1x32xf32> to vector<1x32xf32>
    %126 = vector.broadcast %125 : vector<1x32xf32> to vector<16x32xf32>
    %127 = arith.addf %123, %126 : vector<16x32xf32>
    %128 = arith.addf %3, %127 : vector<16x32xf32>
    %cst_43 = arith.constant dense<0.000000e+00> : vector<16xf32>
    %129 = vector.multi_reduction <add>, %128, %cst_43 [1] : vector<16x32xf32> to vector<16xf32>
    %130 = vector.shape_cast %129 : vector<16xf32> to vector<16x1xf32>
    %cst_44 = arith.constant 3.200000e+01 : f32
    %131 = vector.broadcast %cst_44 : f32 to vector<16x1xf32>
    %132 = arith.divf %130, %131 : vector<16x1xf32>
    %133 = vector.broadcast %132 : vector<16x1xf32> to vector<16x32xf32>
    %134 = arith.subf %128, %133 : vector<16x32xf32>
    %135 = arith.mulf %134, %134 : vector<16x32xf32>
    %cst_45 = arith.constant dense<0.000000e+00> : vector<16xf32>
    %136 = vector.multi_reduction <add>, %135, %cst_45 [1] : vector<16x32xf32> to vector<16xf32>
    %137 = vector.shape_cast %136 : vector<16xf32> to vector<16x1xf32>
    %cst_46 = arith.constant 3.200000e+01 : f32
    %138 = vector.broadcast %cst_46 : f32 to vector<16x1xf32>
    %139 = arith.divf %137, %138 : vector<16x1xf32>
    %140 = vector.broadcast %132 : vector<16x1xf32> to vector<16x32xf32>
    %141 = arith.subf %128, %140 : vector<16x32xf32>
    %cst_47 = arith.constant 3.200000e+01 : f32
    %142 = vector.broadcast %cst_47 : f32 to vector<16x1xf32>
    %143 = arith.addf %139, %142 : vector<16x1xf32>
    %144 = math.rsqrt %143 : vector<16x1xf32>
    %145 = vector.broadcast %144 : vector<16x1xf32> to vector<16x32xf32>
    %146 = arith.mulf %141, %145 : vector<16x32xf32>
    %147 = arith.truncf %146 : vector<16x32xf32> to vector<16x32xbf16>
    %c0_48 = arith.constant 0 : index
    %c0_49 = arith.constant 0 : index
    %c0_50 = arith.constant 0 : index
    %148 = vector.load %arg6[%c0_48, %c0_49, %c0_50] : memref<1x32x64xbf16, #tpu.memory_space<vmem>>, vector<1x32x64xbf16>
    %149 = vector.shape_cast %148 : vector<1x32x64xbf16> to vector<32x64xbf16>
    %cst_51 = arith.constant dense<0.000000e+00> : vector<16x64xf32>
    %150 = tpu.matmul %147, %149, %cst_51 {dimension_numbers = #tpu.dot_dimension_numbers<[1], [0], [0], [1], [0, 0, 1, 1], [], []>} : vector<16x32xbf16>, vector<32x64xbf16>, vector<16x64xf32> -> vector<16x64xf32>
    %c0_52 = arith.constant 0 : index
    %c0_53 = arith.constant 0 : index
    %c0_54 = arith.constant 0 : index
    %151 = vector.load %arg7[%c0_52, %c0_53, %c0_54] : memref<1x1x64xf32, #tpu.memory_space<vmem>>, vector<1x1x64xf32>
    %152 = vector.shape_cast %151 : vector<1x1x64xf32> to vector<1x64xf32>
    %153 = vector.broadcast %152 : vector<1x64xf32> to vector<16x64xf32>
    %154 = arith.addf %150, %153 : vector<16x64xf32>
    %cst_55 = arith.constant 0.000000e+00 : f32
    %155 = vector.broadcast %cst_55 : f32 to vector<16x64xf32>
    %156 = arith.maximumf %154, %155 : vector<16x64xf32>
    %157 = arith.truncf %156 : vector<16x64xf32> to vector<16x64xbf16>
    %c0_56 = arith.constant 0 : index
    %c0_57 = arith.constant 0 : index
    %c0_58 = arith.constant 0 : index
    %158 = vector.load %arg8[%c0_56, %c0_57, %c0_58] : memref<1x64x32xbf16, #tpu.memory_space<vmem>>, vector<1x64x32xbf16>
    %159 = vector.shape_cast %158 : vector<1x64x32xbf16> to vector<64x32xbf16>
    %cst_59 = arith.constant dense<0.000000e+00> : vector<16x32xf32>
    %160 = tpu.matmul %157, %159, %cst_59 {dimension_numbers = #tpu.dot_dimension_numbers<[1], [0], [0], [1], [0, 0, 1, 1], [], []>} : vector<16x64xbf16>, vector<64x32xbf16>, vector<16x32xf32> -> vector<16x32xf32>
    %c0_60 = arith.constant 0 : index
    %c0_61 = arith.constant 0 : index
    %c0_62 = arith.constant 0 : index
    %161 = vector.load %arg9[%c0_60, %c0_61, %c0_62] : memref<1x1x32xf32, #tpu.memory_space<vmem>>, vector<1x1x32xf32>
    %162 = vector.shape_cast %161 : vector<1x1x32xf32> to vector<1x32xf32>
    %163 = vector.broadcast %162 : vector<1x32xf32> to vector<16x32xf32>
    %164 = arith.addf %160, %163 : vector<16x32xf32>
    %c0_63 = arith.constant 0 : index
    %c0_64 = arith.constant 0 : index
    %165 = vector.load %arg12[%c0_63, %c0_64] : memref<16x32xf32, #tpu.memory_space<vmem>>, vector<16x32xf32>
    tpu.vector_store %arg12[%c0_63, %c0_64], %164 {strides = array<i32>} : memref<16x32xf32, #tpu.memory_space<vmem>>, vector<16x32xf32>,
    %166 = arith.cmpi eq, %4, %5 : vector<16x16xi32>
    %cst_65 = arith.constant 0.000000e+00 : f32
    %167 = vector.shape_cast %139 : vector<16x1xf32> to vector<16x1xf32>
    %168 = vector.broadcast %167 : vector<16x1xf32> to vector<16x16xf32>
    %169 = vector.broadcast %cst_65 : f32 to vector<16x16xf32>
    %170 = arith.select %166, %168, %169 : vector<16x16xi1>, vector<16x16xf32>
    %cst_66 = arith.constant dense<0.000000e+00> : vector<16xf32>
    %171 = vector.multi_reduction <add>, %170, %cst_66 [0] : vector<16x16xf32> to vector<16xf32>
    %172 = vector.shape_cast %171 : vector<16xf32> to vector<1x16xf32>
    %c0_67 = arith.constant 0 : index
    %c0_68 = arith.constant 0 : index
    %c0_69 = arith.constant 0 : index
    %173 = vector.load %arg11[%c0_67, %c0_68, %c0_69] : memref<1x1x16xf32, #tpu.memory_space<vmem>>, vector<1x1x16xf32>
    %174 = vector.shape_cast %173 : vector<1x1x16xf32> to vector<1x16xf32>
    %175 = vector.shape_cast %172 : vector<1x16xf32> to vector<1x1x16xf32>
    tpu.vector_store %arg11[%c0_67, %c0_68, %c0_69], %175 {strides = array<i32>} : memref<1x1x16xf32, #tpu.memory_space<vmem>>, vector<1x1x16xf32>,
    %c1_i32_70 = arith.constant 1 : i32
    %176 = arith.cmpi eq, %arg0, %c1_i32_70 : i32
    %177 = arith.extui %176 : i1 to i32
    %c0_i32_71 = arith.constant 0 : i32
    %178 = arith.cmpi ne, %177, %c0_i32_71 : i32
    scf.if %178 {
      %c0_72 = arith.constant 0 : index
      %c0_73 = arith.constant 0 : index
      %179 = vector.load %arg10[%c0_72, %c0_73] : memref<16x32xf32, #tpu.memory_space<vmem>>, vector<16x32xf32>
      tpu.vector_store %arg10[%c0_72, %c0_73], %164 {strides = array<i32>} : memref<16x32xf32, #tpu.memory_space<vmem>>, vector<16x32xf32>,
    } else {
    }
    return
  }
  func.func @transform_0(%arg0: i32) -> (i32, i32) {
    %c0_i32 = arith.constant 0 : i32
    %c0_i32_0 = arith.constant 0 : i32
    %c0_i32_1 = arith.constant 0 : i32
    return %c0_i32, %c0_i32_0 : i32, i32
  }
  func.func @transform_1(%arg0: i32) -> (i32, i32, i32) {
    %c0_i32 = arith.constant 0 : i32
    %c0_i32_0 = arith.constant 0 : i32
    %c0_i32_1 = arith.constant 0 : i32
    return %arg0, %c0_i32, %c0_i32_0 : i32, i32, i32
  }
  func.func @transform_2(%arg0: i32) -> (i32, i32, i32) {
    %c0_i32 = arith.constant 0 : i32
    %c0_i32_0 = arith.constant 0 : i32
    %c0_i32_1 = arith.constant 0 : i32
    return %arg0, %c0_i32, %c0_i32_0 : i32, i32, i32
  }
  func.func @transform_3(%arg0: i32) -> (i32, i32, i32) {
    %c0_i32 = arith.constant 0 : i32
    %c0_i32_0 = arith.constant 0 : i32
    %c0_i32_1 = arith.constant 0 : i32
    return %arg0, %c0_i32, %c0_i32_0 : i32, i32, i32
  }
  func.func @transform_4(%arg0: i32) -> (i32, i32, i32) {
    %c0_i32 = arith.constant 0 : i32
    %c0_i32_0 = arith.constant 0 : i32
    %c0_i32_1 = arith.constant 0 : i32
    return %arg0, %c0_i32, %c0_i32_0 : i32, i32, i32
  }
  func.func @transform_5(%arg0: i32) -> (i32, i32, i32) {
    %c0_i32 = arith.constant 0 : i32
    %c0_i32_0 = arith.constant 0 : i32
    %c0_i32_1 = arith.constant 0 : i32
    return %arg0, %c0_i32, %c0_i32_0 : i32, i32, i32
  }
  func.func @transform_6(%arg0: i32) -> (i32, i32, i32) {
    %c0_i32 = arith.constant 0 : i32
    %c0_i32_0 = arith.constant 0 : i32
    %c0_i32_1 = arith.constant 0 : i32
    return %arg0, %c0_i32, %c0_i32_0 : i32, i32, i32
  }
  func.func @transform_7(%arg0: i32) -> (i32, i32, i32) {
    %c0_i32 = arith.constant 0 : i32
    %c0_i32_0 = arith.constant 0 : i32
    %c0_i32_1 = arith.constant 0 : i32
    return %arg0, %c0_i32, %c0_i32_0 : i32, i32, i32
  }
  func.func @transform_8(%arg0: i32) -> (i32, i32, i32) {
    %c0_i32 = arith.constant 0 : i32
    %c0_i32_0 = arith.constant 0 : i32
    %c0_i32_1 = arith.constant 0 : i32
    return %arg0, %c0_i32, %c0_i32_0 : i32, i32, i32
  }
  func.func @transform_9(%arg0: i32) -> (i32, i32) {
    %c0_i32 = arith.constant 0 : i32
    %c0_i32_0 = arith.constant 0 : i32
    %c0_i32_1 = arith.constant 0 : i32
    return %c0_i32, %c0_i32_0 : i32, i32
  }
  func.func @transform_10(%arg0: i32) -> (i32, i32, i32) {
    %c0_i32 = arith.constant 0 : i32
    %c0_i32_0 = arith.constant 0 : i32
    %c0_i32_1 = arith.constant 0 : i32
    return %arg0, %c0_i32, %c0_i32_0 : i32, i32, i32
  }
}

</mosaic_0001>

<llo_original>
// kernel: tpu_custom_call.1
$region0: #{tpu_custom_call.1}
  #allocation0 [shape = 'u32[]', space=smem, size = 0x4, offset = 0x4, fixed_abs, tag = 'smem constant byte address 0x4 - core index']
  #allocation1 [shape = 'u32[144,128]{1,0:T(1,128)}', space=vmem, size = 0x12000, scoped, tag = 'internal scratch']
  #allocation2 [shape = 'f32[16,32]{1,0:T(8,128)}', space=vmem, size = 0x2000, scoped, tag = 'scratch operand']
  %s0 = inlined_call_operand.hbm [shape: f32[16,32], index: 0, kind: input, shape index: {}]
  %s1 = inlined_call_operand.vmem [shape: bf16[2,32,96], index: 1, kind: input, shape index: {}]
  %s2 = inlined_call_operand.vmem [shape: f32[2,1,96], index: 2, kind: input, shape index: {}]
  %s3 = inlined_call_operand.vmem [shape: bf16[2,32,32], index: 3, kind: input, shape index: {}]
  %s4 = inlined_call_operand.vmem [shape: f32[2,1,32], index: 4, kind: input, shape index: {}]
  %s5 = inlined_call_operand.vmem [shape: bf16[2,32,64], index: 5, kind: input, shape index: {}]
  %s6 = inlined_call_operand.vmem [shape: f32[2,1,64], index: 6, kind: input, shape index: {}]
  %s7 = inlined_call_operand.vmem [shape: bf16[2,64,32], index: 7, kind: input, shape index: {}]
  %s8 = inlined_call_operand.vmem [shape: f32[2,1,32], index: 8, kind: input, shape index: {}]
  %s9 = inlined_call_operand.hbm [shape: f32[16,32], index: 9, kind: output, shape index: {0}]
  %s10 = inlined_call_operand.hbm [shape: f32[2,1,16], index: 10, kind: output, shape index: {1}]
  %11 = xla_tuple %s9, %s10
  %s12 = sld [smem:[#allocation0]]
  $region89: #{tpu_custom_call.1} parent=0
    _
  %s14 = ssub.s32 1, %s12
  %s15 = scalar_select 0, %s14, %s12
  $region1: #{tpu_custom_call.1} parent=0
    #allocation3 [shape = 'u8[8192]{0}', space=vmem, size = 0x2000, scoped, tag = 'input window, operand 0, single buffered']
    #allocation4 [shape = 's32[2]{0}', space=sflag, size = 0x8, scoped, tag = 'scoped memory for tpu_custom_call.1']
    #allocation5 [shape = 's32[2]{0}', space=sflag, size = 0x8, scoped, tag = 'scoped memory for tpu_custom_call.1']
    #allocation6 [shape = 'u8[8192]{0}', space=vmem, size = 0x2000, scoped, tag = 'output window, operand 0, single buffered']
    #allocation7 [shape = 'u8[1024]{0}', space=vmem, size = 0x400, scoped, tag = 'output window, operand 1']
    #allocation8 [shape = 's32[2]{0}', space=sflag, size = 0x8, scoped, tag = 'scoped memory for tpu_custom_call.1']
    %16 = vsyncpa [#allocation4], 0
    %17 = vsyncpa [#allocation5], 0
    %18 = vsyncpa [#allocation8], 0
    %s19 = scalar_lea.sflag [#allocation8], 1
    %20 = vsyncpa %s19, 0
    loop: start=0, step=1, limit=4
    $region2: #{tpu_custom_call.1} parent=1 // loop_pre_header
      _
    $region3: #{tpu_custom_call.1} parent=1 // loop_header
      %s22 = sphi 0, %s26
      %p23 = scmp.ge.s32.totalorder %s22, 4
      %s30 = sphi 0, %s30
      %s32 = sphi 0, %s30
      %s33 = sphi 0, %s32
      %s47 = sphi 0, %s33
      %s53 = sphi 0, %s55
      %s56 = sphi 0, %s53
      %s57 = sphi 0, %s56
      %s73 = sphi 0, %s57
      %s79 = sphi 0, %s81
      %s82 = sphi 0, %s79
      %s83 = sphi 0, %s82
      %s99 = sphi 0, %s83
      %s105 = sphi 0, %s107
      %s108 = sphi 0, %s105
      %s109 = sphi 0, %s108
      %s125 = sphi 0, %s109
      %s131 = sphi 0, %s133
      %s134 = sphi 0, %s131
      %s135 = sphi 0, %s134
      %s151 = sphi 0, %s135
      %s157 = sphi 0, %s159
      %s160 = sphi 0, %s157
      %s161 = sphi 0, %s160
      %s177 = sphi 0, %s161
      %s183 = sphi 0, %s185
      %s186 = sphi 0, %s183
      %s187 = sphi 0, %s186
      %s203 = sphi 0, %s187
      %s209 = sphi 0, %s211
      %s212 = sphi 0, %s209
      %s213 = sphi 0, %s212
      %s229 = sphi 0, %s213
      %s235 = sphi 0, %s237
      %s238 = sphi 0, %s235
      %s239 = sphi 0, %s238
      %s255 = sphi 0, %s239
      %s259 = sphi 0, %s259
      %s261 = sphi 0, %s259
      %s262 = sphi 0, %s261
      %s276 = sphi 0, %s262
      %s282 = sphi 0, %s284
      %s285 = sphi 0, %s282
      %s286 = sphi 0, %s285
      %s302 = sphi 0, %s286
    $region4: #{tpu_custom_call.1} parent=1 // loop_header_branch
      %25 = sbr.rel (%p23) target = $region8
    $region5: #{tpu_custom_call.1} parent=1 // loop_body
      %s27 = ssub.s32 %s22, 1
      %s28 = ssub.s32 %s22, 2
      %s29 = sadd.s32 %s22, 1
      %s31 = sadd.s32 %s30, 1
      %p34 = scmp.eq.s32.totalorder %s22, 1
      %p35 = scmp.ne.s32.totalorder %s30, %s32
      %p36 = scmp.eq.s32.totalorder %s22, 0
      %p37 = por %p35, %p36
      %p38 = scmp.ne.s32.totalorder %s30, %s32
      %p39 = scmp.eq.s32.totalorder %s27, 1
      %p40 = por %p38, %p39
      %p41 = scmp.ne.s32.totalorder %s32, %s33
      %p42 = scmp.eq.s32.totalorder %s27, 0
      %p43 = por %p41, %p42
      %p44 = scmp.ne.s32.totalorder %s32, %s33
      %p45 = scmp.eq.s32.totalorder %s28, 1
      %p46 = por %p44, %p45
      %p48 = scmp.ne.s32.totalorder %s33, %s47
      %p49 = scmp.eq.s32.totalorder %s28, 0
      %p50 = por %p48, %p49
      %s51 = ssub.s32 %s22, %s29
      %p52 = scmp.eq.s32.totalorder %s51, 0
      %s54 = sadd.s32 %s53, 1
      %s55 = scalar_select %p52, %s53, %s54
      %p58 = pneg %p52
      %p59 = scmp.eq.s32.totalorder %s22, 1
      %p60 = por %p58, %p59
      %p61 = scmp.ne.s32.totalorder %s53, %s56
      %p62 = scmp.eq.s32.totalorder %s22, 0
      %p63 = por %p61, %p62
      %p64 = scmp.ne.s32.totalorder %s53, %s56
      %p65 = scmp.eq.s32.totalorder %s27, 1
      %p66 = por %p64, %p65
      %p67 = scmp.ne.s32.totalorder %s56, %s57
      %p68 = scmp.eq.s32.totalorder %s27, 0
      %p69 = por %p67, %p68
      %p70 = scmp.ne.s32.totalorder %s56, %s57
      %p71 = scmp.eq.s32.totalorder %s28, 1
      %p72 = por %p70, %p71
      %p74 = scmp.ne.s32.totalorder %s57, %s73
      %p75 = scmp.eq.s32.totalorder %s28, 0
      %p76 = por %p74, %p75
      %s77 = ssub.s32 %s22, %s29
      %p78 = scmp.eq.s32.totalorder %s77, 0
      %s80 = sadd.s32 %s79, 1
      %s81 = scalar_select %p78, %s79, %s80
      %p84 = pneg %p78
      %p85 = scmp.eq.s32.totalorder %s22, 1
      %p86 = por %p84, %p85
      %p87 = scmp.ne.s32.totalorder %s79, %s82
      %p88 = scmp.eq.s32.totalorder %s22, 0
      %p89 = por %p87, %p88
      %p90 = scmp.ne.s32.totalorder %s79, %s82
      %p91 = scmp.eq.s32.totalorder %s27, 1
      %p92 = por %p90, %p91
      %p93 = scmp.ne.s32.totalorder %s82, %s83
      %p94 = scmp.eq.s32.totalorder %s27, 0
      %p95 = por %p93, %p94
      %p96 = scmp.ne.s32.totalorder %s82, %s83
      %p97 = scmp.eq.s32.totalorder %s28, 1
      %p98 = por %p96, %p97
      %p100 = scmp.ne.s32.totalorder %s83, %s99
      %p101 = scmp.eq.s32.totalorder %s28, 0
      %p102 = por %p100, %p101
      %s103 = ssub.s32 %s22, %s29
      %p104 = scmp.eq.s32.totalorder %s103, 0
      %s106 = sadd.s32 %s105, 1
      %s107 = scalar_select %p104, %s105, %s106
      %p110 = pneg %p104
      %p111 = scmp.eq.s32.totalorder %s22, 1
      %p112 = por %p110, %p111
      %p113 = scmp.ne.s32.totalorder %s105, %s108
      %p114 = scmp.eq.s32.totalorder %s22, 0
      %p115 = por %p113, %p114
      %p116 = scmp.ne.s32.totalorder %s105, %s108
      %p117 = scmp.eq.s32.totalorder %s27, 1
      %p118 = por %p116, %p117
      %p119 = scmp.ne.s32.totalorder %s108, %s109
      %p120 = scmp.eq.s32.totalorder %s27, 0
      %p121 = por %p119, %p120
      %p122 = scmp.ne.s32.totalorder %s108, %s109
      %p123 = scmp.eq.s32.totalorder %s28, 1
      %p124 = por %p122, %p123
      %p126 = scmp.ne.s32.totalorder %s109, %s125
      %p127 = scmp.eq.s32.totalorder %s28, 0
      %p128 = por %p126, %p127
      %s129 = ssub.s32 %s22, %s29
      %p130 = scmp.eq.s32.totalorder %s129, 0
      %s132 = sadd.s32 %s131, 1
      %s133 = scalar_select %p130, %s131, %s132
      %p136 = pneg %p130
      %p137 = scmp.eq.s32.totalorder %s22, 1
      %p138 = por %p136, %p137
      %p139 = scmp.ne.s32.totalorder %s131, %s134
      %p140 = scmp.eq.s32.totalorder %s22, 0
      %p141 = por %p139, %p140
      %p142 = scmp.ne.s32.totalorder %s131, %s134
      %p143 = scmp.eq.s32.totalorder %s27, 1
      %p144 = por %p142, %p143
      %p145 = scmp.ne.s32.totalorder %s134, %s135
      %p146 = scmp.eq.s32.totalorder %s27, 0
      %p147 = por %p145, %p146
      %p148 = scmp.ne.s32.totalorder %s134, %s135
      %p149 = scmp.eq.s32.totalorder %s28, 1
      %p150 = por %p148, %p149
      %p152 = scmp.ne.s32.totalorder %s135, %s151
      %p153 = scmp.eq.s32.totalorder %s28, 0
      %p154 = por %p152, %p153
      %s155 = ssub.s32 %s22, %s29
      %p156 = scmp.eq.s32.totalorder %s155, 0
      %s158 = sadd.s32 %s157, 1
      %s159 = scalar_select %p156, %s157, %s158
      %p162 = pneg %p156
      %p163 = scmp.eq.s32.totalorder %s22, 1
      %p164 = por %p162, %p163
      %p165 = scmp.ne.s32.totalorder %s157, %s160
      %p166 = scmp.eq.s32.totalorder %s22, 0
      %p167 = por %p165, %p166
      %p168 = scmp.ne.s32.totalorder %s157, %s160
      %p169 = scmp.eq.s32.totalorder %s27, 1
      %p170 = por %p168, %p169
      %p171 = scmp.ne.s32.totalorder %s160, %s161
      %p172 = scmp.eq.s32.totalorder %s27, 0
      %p173 = por %p171, %p172
      %p174 = scmp.ne.s32.totalorder %s160, %s161
      %p175 = scmp.eq.s32.totalorder %s28, 1
      %p176 = por %p174, %p175
      %p178 = scmp.ne.s32.totalorder %s161, %s177
      %p179 = scmp.eq.s32.totalorder %s28, 0
      %p180 = por %p178, %p179
      %s181 = ssub.s32 %s22, %s29
      %p182 = scmp.eq.s32.totalorder %s181, 0
      %s184 = sadd.s32 %s183, 1
      %s185 = scalar_select %p182, %s183, %s184
      %p188 = pneg %p182
      %p189 = scmp.eq.s32.totalorder %s22, 1
      %p190 = por %p188, %p189
      %p191 = scmp.ne.s32.totalorder %s183, %s186
      %p192 = scmp.eq.s32.totalorder %s22, 0
      %p193 = por %p191, %p192
      %p194 = scmp.ne.s32.totalorder %s183, %s186
      %p195 = scmp.eq.s32.totalorder %s27, 1
      %p196 = por %p194, %p195
      %p197 = scmp.ne.s32.totalorder %s186, %s187
      %p198 = scmp.eq.s32.totalorder %s27, 0
      %p199 = por %p197, %p198
      %p200 = scmp.ne.s32.totalorder %s186, %s187
      %p201 = scmp.eq.s32.totalorder %s28, 1
      %p202 = por %p200, %p201
      %p204 = scmp.ne.s32.totalorder %s187, %s203
      %p205 = scmp.eq.s32.totalorder %s28, 0
      %p206 = por %p204, %p205
      %s207 = ssub.s32 %s22, %s29
      %p208 = scmp.eq.s32.totalorder %s207, 0
      %s210 = sadd.s32 %s209, 1
      %s211 = scalar_select %p208, %s209, %s210
      %p214 = pneg %p208
      %p215 = scmp.eq.s32.totalorder %s22, 1
      %p216 = por %p214, %p215
      %p217 = scmp.ne.s32.totalorder %s209, %s212
      %p218 = scmp.eq.s32.totalorder %s22, 0
      %p219 = por %p217, %p218
      %p220 = scmp.ne.s32.totalorder %s209, %s212
      %p221 = scmp.eq.s32.totalorder %s27, 1
      %p222 = por %p220, %p221
      %p223 = scmp.ne.s32.totalorder %s212, %s213
      %p224 = scmp.eq.s32.totalorder %s27, 0
      %p225 = por %p223, %p224
      %p226 = scmp.ne.s32.totalorder %s212, %s213
      %p227 = scmp.eq.s32.totalorder %s28, 1
      %p228 = por %p226, %p227
      %p230 = scmp.ne.s32.totalorder %s213, %s229
      %p231 = scmp.eq.s32.totalorder %s28, 0
      %p232 = por %p230, %p231
      %s233 = ssub.s32 %s22, %s29
      %p234 = scmp.eq.s32.totalorder %s233, 0
      %s236 = sadd.s32 %s235, 1
      %s237 = scalar_select %p234, %s235, %s236
      %p240 = pneg %p234
      %p241 = scmp.eq.s32.totalorder %s22, 1
      %p242 = por %p240, %p241
      %p243 = scmp.ne.s32.totalorder %s235, %s238
      %p244 = scmp.eq.s32.totalorder %s22, 0
      %p245 = por %p243, %p244
      %p246 = scmp.ne.s32.totalorder %s235, %s238
      %p247 = scmp.eq.s32.totalorder %s27, 1
      %p248 = por %p246, %p247
      %p249 = scmp.ne.s32.totalorder %s238, %s239
      %p250 = scmp.eq.s32.totalorder %s27, 0
      %p251 = por %p249, %p250
      %p252 = scmp.ne.s32.totalorder %s238, %s239
      %p253 = scmp.eq.s32.totalorder %s28, 1
      %p254 = por %p252, %p253
      %p256 = scmp.ne.s32.totalorder %s239, %s255
      %p257 = scmp.eq.s32.totalorder %s28, 0
      %p258 = por %p256, %p257
      %s260 = sadd.s32 %s259, 1
      %p263 = scmp.eq.s32.totalorder %s22, 1
      %p264 = scmp.ne.s32.totalorder %s259, %s261
      %p265 = scmp.eq.s32.totalorder %s22, 0
      %p266 = por %p264, %p265
      %p267 = scmp.ne.s32.totalorder %s259, %s261
      %p268 = scmp.eq.s32.totalorder %s27, 1
      %p269 = por %p267, %p268
      %p270 = scmp.ne.s32.totalorder %s261, %s262
      %p271 = scmp.eq.s32.totalorder %s27, 0
      %p272 = por %p270, %p271
      %p273 = scmp.ne.s32.totalorder %s261, %s262
      %p274 = scmp.eq.s32.totalorder %s28, 1
      %p275 = por %p273, %p274
      %p277 = scmp.ne.s32.totalorder %s262, %s276
      %p278 = scmp.eq.s32.totalorder %s28, 0
      %p279 = por %p277, %p278
      %s280 = ssub.s32 %s22, %s29
      %p281 = scmp.eq.s32.totalorder %s280, 0
      %s283 = sadd.s32 %s282, 1
      %s284 = scalar_select %p281, %s282, %s283
      %p287 = pneg %p281
      %p288 = scmp.eq.s32.totalorder %s22, 1
      %p289 = por %p287, %p288
      %p290 = scmp.ne.s32.totalorder %s282, %s285
      %p291 = scmp.eq.s32.totalorder %s22, 0
      %p292 = por %p290, %p291
      %p293 = scmp.ne.s32.totalorder %s282, %s285
      %p294 = scmp.eq.s32.totalorder %s27, 1
      %p295 = por %p293, %p294
      %p296 = scmp.ne.s32.totalorder %s285, %s286
      %p297 = scmp.eq.s32.totalorder %s27, 0
      %p298 = por %p296, %p297
      %p299 = scmp.ne.s32.totalorder %s285, %s286
      %p300 = scmp.eq.s32.totalorder %s28, 1
      %p301 = por %p299, %p300
      %p303 = scmp.ne.s32.totalorder %s286, %s302
      %p304 = scmp.eq.s32.totalorder %s28, 0
      %p305 = por %p303, %p304
      %p306 = scmp.le.s32.totalorder 1, %s22
      %p307 = scmp.lt.s32.totalorder %s22, 3
      %p308 = pnand %p306, %p307
      %p309 = pneg %p308
      // Predicated region
      $region9: #{tpu_custom_call.1} parent=5 // pred_check
        _
      $region10: #{tpu_custom_call.1} parent=5 // pred_check_branch
        %311 = sbr.rel (%p308) target = $region12
      $region11: #{tpu_custom_call.1} parent=5 // pred_region
        %s312 = ssub.s32 %s22, 1
        // Predicated region
        $region13: #{tpu_custom_call.1} parent=11 // pred_check
          %p313 = pneg %p43
        $region14: #{tpu_custom_call.1} parent=11 // pred_check_branch
          %315 = sbr.rel (%p313) target = $region16
        $region15: #{tpu_custom_call.1} parent=11 // pred_region
          %s317 = ssub.s32 256, 256
          %318 = vsyncadd [#allocation4], %s317
          %s319 = sshll.u32 [#allocation3], 4
          %s320 = int_to_ptr.vmem [resolvable:$true] %s319
          %325 = dma.hbm_to_vmem [thread:$0]  %s0, 256, %s320, [#allocation4], 128, 128, 8
        $region16: #{tpu_custom_call.1} parent=11 // pred_fallthru
          _
      $region12: #{tpu_custom_call.1} parent=5 // pred_fallthru
        _
      %p326 = scmp.lt.s32.totalorder %s22, 2
      // Predicated region
      $region17: #{tpu_custom_call.1} parent=5 // pred_check
        %p327 = pneg %p326
      $region18: #{tpu_custom_call.1} parent=5 // pred_check_branch
        %329 = sbr.rel (%p327) target = $region20
      $region19: #{tpu_custom_call.1} parent=5 // pred_region
        // Predicated region
        $region21: #{tpu_custom_call.1} parent=19 // pred_check
          %p330 = pneg %p63
        $region22: #{tpu_custom_call.1} parent=19 // pred_check_branch
          %332 = sbr.rel (%p330) target = $region24
        $region23: #{tpu_custom_call.1} parent=19 // pred_region
          %p333 = scmp.lt.s32.totalorder %s22, 1
          %s334 = scalar_select %p333, %s22, 1
          %s335 = smul.addr %s334, 4
          %s336 = smul.addr %s335, 4
          %s337 = scalar_lea.vmem %s1, %s336
        $region24: #{tpu_custom_call.1} parent=19 // pred_fallthru
          _
        // Predicated region
        $region25: #{tpu_custom_call.1} parent=19 // pred_check
          %p338 = pneg %p89
        $region26: #{tpu_custom_call.1} parent=19 // pred_check_branch
          %340 = sbr.rel (%p338) target = $region28
        $region27: #{tpu_custom_call.1} parent=19 // pred_region
          %p341 = scmp.lt.s32.totalorder %s22, 1
          %s342 = scalar_select %p341, %s22, 1
          %s343 = scalar_lea.vmem %s2, %s342
        $region28: #{tpu_custom_call.1} parent=19 // pred_fallthru
          _
        // Predicated region
        $region29: #{tpu_custom_call.1} parent=19 // pred_check
          %p344 = pneg %p115
        $region30: #{tpu_custom_call.1} parent=19 // pred_check_branch
          %346 = sbr.rel (%p344) target = $region32
        $region31: #{tpu_custom_call.1} parent=19 // pred_region
          %p347 = scmp.lt.s32.totalorder %s22, 1
          %s348 = scalar_select %p347, %s22, 1
          %s349 = smul.addr %s348, 4
          %s350 = smul.addr %s349, 4
          %s351 = scalar_lea.vmem %s3, %s350
        $region32: #{tpu_custom_call.1} parent=19 // pred_fallthru
          _
        // Predicated region
        $region33: #{tpu_custom_call.1} parent=19 // pred_check
          %p352 = pneg %p141
        $region34: #{tpu_custom_call.1} parent=19 // pred_check_branch
          %354 = sbr.rel (%p352) target = $region36
        $region35: #{tpu_custom_call.1} parent=19 // pred_region
          %p355 = scmp.lt.s32.totalorder %s22, 1
          %s356 = scalar_select %p355, %s22, 1
          %s357 = scalar_lea.vmem %s4, %s356
        $region36: #{tpu_custom_call.1} parent=19 // pred_fallthru
          _
        // Predicated region
        $region37: #{tpu_custom_call.1} parent=19 // pred_check
          %p358 = pneg %p167
        $region38: #{tpu_custom_call.1} parent=19 // pred_check_branch
          %360 = sbr.rel (%p358) target = $region40
        $region39: #{tpu_custom_call.1} parent=19 // pred_region
          %p361 = scmp.lt.s32.totalorder %s22, 1
          %s362 = scalar_select %p361, %s22, 1
          %s363 = smul.addr %s362, 4
          %s364 = smul.addr %s363, 4
          %s365 = scalar_lea.vmem %s5, %s364
        $region40: #{tpu_custom_call.1} parent=19 // pred_fallthru
          _
        // Predicated region
        $region41: #{tpu_custom_call.1} parent=19 // pred_check
          %p366 = pneg %p193
        $region42: #{tpu_custom_call.1} parent=19 // pred_check_branch
          %368 = sbr.rel (%p366) target = $region44
        $region43: #{tpu_custom_call.1} parent=19 // pred_region
          %p369 = scmp.lt.s32.totalorder %s22, 1
          %s370 = scalar_select %p369, %s22, 1
          %s371 = scalar_lea.vmem %s6, %s370
        $region44: #{tpu_custom_call.1} parent=19 // pred_fallthru
          _
        // Predicated region
        $region45: #{tpu_custom_call.1} parent=19 // pred_check
          %p372 = pneg %p219
        $region46: #{tpu_custom_call.1} parent=19 // pred_check_branch
          %374 = sbr.rel (%p372) target = $region48
        $region47: #{tpu_custom_call.1} parent=19 // pred_region
          %p375 = scmp.lt.s32.totalorder %s22, 1
          %s376 = scalar_select %p375, %s22, 1
          %s377 = smul.addr %s376, 8
          %s378 = smul.addr %s377, 4
          %s379 = scalar_lea.vmem %s7, %s378
        $region48: #{tpu_custom_call.1} parent=19 // pred_fallthru
          _
        // Predicated region
        $region49: #{tpu_custom_call.1} parent=19 // pred_check
          %p380 = pneg %p245
        $region50: #{tpu_custom_call.1} parent=19 // pred_check_branch
          %382 = sbr.rel (%p380) target = $region52
        $region51: #{tpu_custom_call.1} parent=19 // pred_region
          %p383 = scmp.lt.s32.totalorder %s22, 1
          %s384 = scalar_select %p383, %s22, 1
          %s385 = scalar_lea.vmem %s8, %s384
        $region52: #{tpu_custom_call.1} parent=19 // pred_fallthru
          _
      $region20: #{tpu_custom_call.1} parent=5 // pred_fallthru
        _
      %p386 = scmp.le.s32.totalorder 1, %s22
      %p387 = scmp.lt.s32.totalorder %s22, 3
      %p388 = pnand %p386, %p387
      %p389 = pneg %p388
      // Predicated region
      $region53: #{tpu_custom_call.1} parent=5 // pred_check
        _
      $region54: #{tpu_custom_call.1} parent=5 // pred_check_branch
        %391 = sbr.rel (%p388) target = $region56
      $region55: #{tpu_custom_call.1} parent=5 // pred_region
        %s392 = ssub.s32 %s22, 1
        // Predicated region
        $region57: #{tpu_custom_call.1} parent=55 // pred_check
          %p393 = pneg %p43
        $region58: #{tpu_custom_call.1} parent=55 // pred_check_branch
          %395 = sbr.rel (%p393) target = $region60
        $region59: #{tpu_custom_call.1} parent=55 // pred_region
          %396 = dma.done [#allocation4], 256
        $region60: #{tpu_custom_call.1} parent=55 // pred_fallthru
          _
        %p397 = pneg %p43
        %p398 = pneg %p40
        %p399 = scmp.lt.s32.totalorder %s27, 1
        %s400 = scalar_select %p399, %s27, 1
        %s401 = smul.addr %s400, 4
        %s402 = smul.addr %s401, 4
        %s403 = scalar_lea.vmem %s1, %s402
        %p404 = pneg %p69
        %p405 = pneg %p66
        %p406 = scmp.lt.s32.totalorder %s27, 1
        %s407 = scalar_select %p406, %s27, 1
        %s408 = scalar_lea.vmem %s2, %s407
        %p409 = pneg %p95
        %p410 = pneg %p92
        %p411 = scmp.lt.s32.totalorder %s27, 1
        %s412 = scalar_select %p411, %s27, 1
        %s413 = smul.addr %s412, 4
        %s414 = smul.addr %s413, 4
        %s415 = scalar_lea.vmem %s3, %s414
        %p416 = pneg %p121
        %p417 = pneg %p118
        %p418 = scmp.lt.s32.totalorder %s27, 1
        %s419 = scalar_select %p418, %s27, 1
        %s420 = scalar_lea.vmem %s4, %s419
        %p421 = pneg %p147
        %p422 = pneg %p144
        %p423 = scmp.lt.s32.totalorder %s27, 1
        %s424 = scalar_select %p423, %s27, 1
        %s425 = smul.addr %s424, 4
        %s426 = smul.addr %s425, 4
        %s427 = scalar_lea.vmem %s5, %s426
        %p428 = pneg %p173
        %p429 = pneg %p170
        %p430 = scmp.lt.s32.totalorder %s27, 1
        %s431 = scalar_select %p430, %s27, 1
        %s432 = scalar_lea.vmem %s6, %s431
        %p433 = pneg %p199
        %p434 = pneg %p196
        %p435 = scmp.lt.s32.totalorder %s27, 1
        %s436 = scalar_select %p435, %s27, 1
        %s437 = smul.addr %s436, 8
        %s438 = smul.addr %s437, 4
        %s439 = scalar_lea.vmem %s7, %s438
        %p440 = pneg %p225
        %p441 = pneg %p222
        %p442 = scmp.lt.s32.totalorder %s27, 1
        %s443 = scalar_select %p442, %s27, 1
        %s444 = scalar_lea.vmem %s8, %s443
        %p445 = pneg %p251
        %p446 = pneg %p248
        %p447 = pneg %p272
        %p448 = pneg %p269
        %p449 = pneg %p298
        %p450 = pneg %p295
        %s451 = sand.u32 %s285, 1
        %s452 = scalar_lea.sflag [#allocation8], %s451
        %s453 = sand.u32 %s285, 1
        %s454 = scalar_lea.vmem [#allocation7], %s453
        %p455 = scmp.lt.s32.totalorder %s27, 1
        %s456 = scalar_select %p455, %s27, 1
        %s457 = smul.addr %s456, 4
        %s458 = smul.addr %s457, 4
        %s459 = scalar_lea.vmem %s1, %s458
        %p460 = scmp.lt.s32.totalorder %s27, 1
        %s461 = scalar_select %p460, %s27, 1
        %s462 = scalar_lea.vmem %s2, %s461
        %p463 = scmp.lt.s32.totalorder %s27, 1
        %s464 = scalar_select %p463, %s27, 1
        %s465 = smul.addr %s464, 4
        %s466 = smul.addr %s465, 4
        %s467 = scalar_lea.vmem %s3, %s466
        %p468 = scmp.lt.s32.totalorder %s27, 1
        %s469 = scalar_select %p468, %s27, 1
        %s470 = scalar_lea.vmem %s4, %s469
        %p471 = scmp.lt.s32.totalorder %s27, 1
        %s472 = scalar_select %p471, %s27, 1
        %s473 = smul.addr %s472, 4
        %s474 = smul.addr %s473, 4
        %s475 = scalar_lea.vmem %s5, %s474
        %p476 = scmp.lt.s32.totalorder %s27, 1
        %s477 = scalar_select %p476, %s27, 1
        %s478 = scalar_lea.vmem %s6, %s477
        %p479 = scmp.lt.s32.totalorder %s27, 1
        %s480 = scalar_select %p479, %s27, 1
        %s481 = smul.addr %s480, 8
        %s482 = smul.addr %s481, 4
        %s483 = scalar_lea.vmem %s7, %s482
        %p484 = scmp.lt.s32.totalorder %s27, 1
        %s485 = scalar_select %p484, %s27, 1
        %s486 = scalar_lea.vmem %s8, %s485
        %p488 = scmp.eq.s32.totalorder %s27, 0
        // Predicated region
        $region61: #{tpu_custom_call.1} parent=55 // pred_check
          %p489 = pneg %p488
        $region62: #{tpu_custom_call.1} parent=55 // pred_check_branch
          %491 = sbr.rel (%p489) target = $region64
        $region63: #{tpu_custom_call.1} parent=55 // pred_region
          %v492 = vld [vmem:[#allocation3] sm:$0xff]
          %v493 = vld [vmem:[#allocation3 + $0x8] sm:$0xff]
          %vm494 = vcmask 261120
          %495 = vst.msk [vmem:[#allocation2] sm:$0xff] %vm494, %v492
          %496 = vst.msk [vmem:[#allocation2 + $0x8] sm:$0xff] %vm494, %v493
        $region64: #{tpu_custom_call.1} parent=55 // pred_fallthru
          _
        %v497 = vld [vmem:[#allocation2] sm:$0xff]
        %v498 = vld [vmem:[#allocation2 + $0x8] sm:$0xff]
        %v499 = vlaneseq
        %v500 = vshrl.u32 %v499, 7
        %v501 = vadd.s32 %v500, 8
        %v502 = vlaneseq
        %v503 = vand.u32 %v502, 127
        %vm504 = vcmp.lt.s32.totalorder %v500, 0
        %v505 = vsub.s32 0, %v500
        %v506 = vsel %vm504, %v505, %v500
        %v507 = vshrl.u32 %v506, 1
        %v508 = vand.u32 %v506, 1
        %v509 = vsub.s32 0, %v508
        %v510 = vsel %vm504, %v509, %v508
        %vm511 = vcmp.lt.s32.totalorder %v501, 0
        %v512 = vsub.s32 0, %v501
        %v513 = vsel %vm511, %v512, %v501
        %v514 = vshrl.u32 %v513, 1
        %v515 = vand.u32 %v513, 1
        %v516 = vsub.s32 0, %v515
        %v517 = vsel %vm511, %v516, %v515
        %vm518 = vcmp.ne.s32.totalorder %v510, 0
        %vm519 = vcmp.ne.s32.totalorder %v517, 0
        %vm520 = vcmp.lt.s32.totalorder %v510, 0
        %vm521 = vcmp.lt.s32.totalorder %v517, 0
        %vm522 = vmand %vm520, %vm518
        %vm523 = vmand %vm521, %vm519
        %v524 = vadd.s32 %v510, 2
        %v525 = vadd.s32 %v517, 2
        %v526 = vsel %vm522, %v524, %v510
        %v527 = vsel %vm523, %v525, %v517
        %vm528 = vcmp.lt.s32.totalorder %v503, 0
        %v529 = vsub.s32 0, %v503
        %v530 = vsel %vm528, %v529, %v503
        %v531 = vshrl.u32 %v530, 1
        %v532 = vand.u32 %v530, 1
        %v533 = vsub.s32 0, %v532
        %v534 = vsel %vm528, %v533, %v532
        %vm535 = vcmp.ne.s32.totalorder %v534, 0
        %vm536 = vcmp.lt.s32.totalorder %v534, 0
        %vm537 = vmand %vm536, %vm535
        %v538 = vadd.s32 %v534, 2
        %v539 = vsel %vm537, %v538, %v534
        %vm540 = vcmp.eq.s32.totalorder %v526, %v539
        %vm541 = vcmp.eq.s32.totalorder %v527, %v539
        %v542 = vsel %vm540, 0.0, -1e+30
        %v543 = vsel %vm541, 0.0, -1e+30
        %v544 = vpack.c.bf16 %v498, %v497
        %v545 = vld [vmem:[%s459] sm:$0xf]
        %v546 = vld [vmem:[%s459 + $0x4] sm:$0xf]
        %v547 = vld [vmem:[%s459 + $0x8] sm:$0xf]
        %v548 = vld [vmem:[%s459 + $0xc] sm:$0xf]
        %v549 = vld [vmem:[%s462] sm:$0x1]
        %v551 = vlaneseq
        %v552 = vshrl.u32 %v551, 7
        %v553 = vsub.s32 0, %v552
        %v554 = vrot.slane %v549, %v553
        %v560 = vunpack.c.l.b16 %v545
        %v561 = vunpack.c.l.b16 %v546
        %v562 = vunpack.c.l.b16 %v547
        %v563 = vunpack.c.l.b16 %v548
        %v564 = vpack.c.b16 %v561, %v560
        %v565 = vpack.c.b16 %v563, %v562
        %vm568 = vcmask 261120
        %v570 = vsel %vm568, %v544, 0
        %572 = vmatprep.subr.bf16.mxu0 0
        %573 = vmatpush1.bf16.msra.mxu0 0
        %574 = vmatprep.subr.bf16.mxu0 0
        %575 = vmatpush1.bf16.msra.mxu0 0
        %576 = vmatprep.subr.bf16.mxu0 0
        %577 = vmatpush1.bf16.msra.mxu0 0
        %578 = vmatprep.subr.bf16.mxu0 0
        %579 = vmatpush1.bf16.msra.mxu0 0
        %580 = vmatprep.subr.bf16.mxu0 0
        %581 = vmatpush1.bf16.msra.mxu0 0
        %582 = vmatprep.subr.bf16.mxu0 0
        %583 = vmatpush1.bf16.msra.mxu0 0
        %584 = vmatprep.subr.bf16.mxu0 0
        %585 = vmatpush1.bf16.msra.mxu0 %v565
        %586 = vmatprep.subr.bf16.mxu0 0
        %587 = vmatpush1.bf16.msra.mxu0 %v564
        %588 = vmatprep.subr.bf16.mxu0 0
        %589 = vmatpush2.bf16.msra.mxu0 0
        %590 = vmatprep.subr.bf16.mxu0 0
        %591 = vmatpush2.bf16.msra.mxu0 0
        %592 = vmatprep.subr.bf16.mxu0 0
        %593 = vmatpush2.bf16.msra.mxu0 0
        %594 = vmatprep.subr.bf16.mxu0 0
        %595 = vmatpush2.bf16.msra.mxu0 0
        %596 = vmatprep.subr.bf16.mxu0 0
        %597 = vmatpush2.bf16.msra.mxu0 0
        %598 = vmatprep.subr.bf16.mxu0 0
        %599 = vmatpush2.bf16.msra.mxu0 0
        %600 = vmatprep.subr.bf16.mxu0 0
        %601 = vmatpush2.bf16.msra.mxu0 0
        %602 = vmatprep.subr.bf16.mxu0 0
        %603 = vmatpush2.bf16.msra.mxu0 0
        %604 = vmatprep.mubr.bf16.mxu0 0
        %605 = vmatmul.mubr.bf16.gmra.mxu0 %v570
        %v606 = vpop.f32.mrf.mxu0
        %v607 = vadd.f32 %v554, %v606
        %v608 = vpop.f32.mrf.mxu0
        %v609 = vpop.f32.mrf.mxu0
        %v610 = vadd.f32 %v554, %v609
        %v611 = vpop.f32.mrf.mxu0
        %612 = vdwg.mxu0
        %v613 = vpack.c.bf16 %v610, %v607
        %615 = vrot.lane.b32.xlu0 %v613, 96
        %v616 = vpop.permute.xlu0 %615
        %vm617 = vcmask 64512
        %v619 = vsel %vm617, %v613, 0
        %v622 = vsel %vm617, %v616, 0
        %624 = vmatprep.subr.bf16.mxu0 0
        %625 = vmatpush1.bf16.xpose.msra.mxu0 0
        %626 = vmatprep.subr.bf16.mxu0 0
        %627 = vmatpush1.bf16.xpose.msra.mxu0 0
        %628 = vmatprep.subr.bf16.mxu0 0
        %629 = vmatpush1.bf16.xpose.msra.mxu0 0
        %630 = vmatprep.subr.bf16.mxu0 0
        %631 = vmatpush1.bf16.xpose.msra.mxu0 0
        %632 = vmatprep.subr.bf16.mxu0 0
        %633 = vmatpush1.bf16.xpose.msra.mxu0 0
        %634 = vmatprep.subr.bf16.mxu0 0
        %635 = vmatpush1.bf16.xpose.msra.mxu0 0
        %636 = vmatprep.subr.bf16.mxu0 0
        %637 = vmatpush1.bf16.xpose.msra.mxu0 0
        %638 = vmatprep.subr.bf16.mxu0 0
        %639 = vmatpush1.bf16.xpose.msra.mxu0 %v622
        %640 = vmatprep.subr.bf16.mxu0 0
        %641 = vmatpush2.bf16.xpose.msra.mxu0 0
        %642 = vmatprep.subr.bf16.mxu0 0
        %643 = vmatpush2.bf16.xpose.msra.mxu0 0
        %644 = vmatprep.subr.bf16.mxu0 0
        %645 = vmatpush2.bf16.xpose.msra.mxu0 0
        %646 = vmatprep.subr.bf16.mxu0 0
        %647 = vmatpush2.bf16.xpose.msra.mxu0 0
        %648 = vmatprep.subr.bf16.mxu0 0
        %649 = vmatpush2.bf16.xpose.msra.mxu0 0
        %650 = vmatprep.subr.bf16.mxu0 0
        %651 = vmatpush2.bf16.xpose.msra.mxu0 0
        %652 = vmatprep.subr.bf16.mxu0 0
        %653 = vmatpush2.bf16.xpose.msra.mxu0 0
        %654 = vmatprep.subr.bf16.mxu0 0
        %655 = vmatpush2.bf16.xpose.msra.mxu0 0
        %656 = vmatprep.mubr.bf16.mxu0 0
        %657 = vmatmul.mubr.bf16.gmra.mxu0 %v619
        %v658 = vpop.f32.mrf.mxu0
        %v659 = vadd.f32 %v542, %v658
        %v660 = vpop.f32.mrf.mxu0
        %v661 = vpop.f32.mrf.mxu0
        %v662 = vadd.f32 %v543, %v661
        %v663 = vpop.f32.mrf.mxu0
        %664 = vdwg.mxu0
        %vm665 = vcmask 130048
        %v666 = vsel %vm665, %v659, -inf
        %667 = vmax.xlane.f32.xlu0 %v666
        %v668 = vpop.xlane.xlu0 %667
        %v669 = vsel %vm665, %v662, -inf
        %670 = vmax.xlane.f32.xlu0 %v669
        %v671 = vpop.xlane.xlu0 %670
        %v672 = vsub.f32 %v659, %v668
        %v673 = vsub.f32 %v662, %v671
        %v674 = vmul.f32 %v672, 1.442695
        %v675 = vpow.pop %v674
        %v676 = vmul.f32 %v673, 1.442695
        %v677 = vpow.pop %v676
        %v678 = vsel %vm665, %v675, 0.0
        %679 = vadd.xlane.f32.xlu0 %v678
        %v680 = vpop.xlane.xlu0 %679
        %v681 = vsel %vm665, %v677, 0.0
        %682 = vadd.xlane.f32.xlu0 %v681
        %v683 = vpop.xlane.xlu0 %682
        %v684 = vrcp.pop %v680
        %v685 = vrcp.pop %v683
        %v686 = vmul.f32 %v675, %v684
        %v687 = vmul.f32 %v677, %v685
        %v688 = vpack.c.bf16 %v687, %v686
        %689 = vrot.lane.b32.xlu0 %v613, 64
        %v690 = vpop.permute.xlu0 %689
        %v693 = vsel %vm665, %v688, 0
        %695 = vmatprep.subr.bf16.mxu0 0
        %696 = vmatpush1.bf16.msra.mxu0 0
        %697 = vmatprep.subr.bf16.mxu0 0
        %698 = vmatpush1.bf16.msra.mxu0 0
        %699 = vmatprep.subr.bf16.mxu0 0
        %700 = vmatpush1.bf16.msra.mxu0 0
        %701 = vmatprep.subr.bf16.mxu0 0
        %702 = vmatpush1.bf16.msra.mxu0 0
        %703 = vmatprep.subr.bf16.mxu0 0
        %704 = vmatpush1.bf16.msra.mxu0 0
        %705 = vmatprep.subr.bf16.mxu0 0
        %706 = vmatpush1.bf16.msra.mxu0 0
        %707 = vmatprep.subr.bf16.mxu0 0
        %708 = vmatpush1.bf16.msra.mxu0 0
        %709 = vmatprep.subr.bf16.mxu0 0
        %710 = vmatpush1.bf16.msra.mxu0 %v690
        %711 = vmatprep.subr.bf16.mxu0 0
        %712 = vmatpush2.bf16.msra.mxu0 0
        %713 = vmatprep.subr.bf16.mxu0 0
        %714 = vmatpush2.bf16.msra.mxu0 0
        %715 = vmatprep.subr.bf16.mxu0 0
        %716 = vmatpush2.bf16.msra.mxu0 0
        %717 = vmatprep.subr.bf16.mxu0 0
        %718 = vmatpush2.bf16.msra.mxu0 0
        %719 = vmatprep.subr.bf16.mxu0 0
        %720 = vmatpush2.bf16.msra.mxu0 0
        %721 = vmatprep.subr.bf16.mxu0 0
        %722 = vmatpush2.bf16.msra.mxu0 0
        %723 = vmatprep.subr.bf16.mxu0 0
        %724 = vmatpush2.bf16.msra.mxu0 0
        %725 = vmatprep.subr.bf16.mxu0 0
        %726 = vmatpush2.bf16.msra.mxu0 0
        %727 = vmatprep.mubr.bf16.mxu0 0
        %728 = vmatmul.mubr.bf16.gmra.mxu0 %v693
        %v729 = vpop.f32.mrf.mxu0
        %v730 = vadd.f32 0.0, %v729
        %v731 = vpop.f32.mrf.mxu0
        %v732 = vpop.f32.mrf.mxu0
        %v733 = vadd.f32 0.0, %v732
        %v734 = vpop.f32.mrf.mxu0
        %735 = vdwg.mxu0
        %736 = vrot.lane.b32.xlu0 %v613, 120
        %v737 = vpop.permute.xlu0 %736
        %738 = vrot.lane.b32.xlu0 %v613, 88
        %v739 = vpop.permute.xlu0 %738
        %v741 = vsel %vm617, %v737, 0
        %v744 = vsel %vm617, %v739, 0
        %746 = vmatprep.subr.bf16.mxu0 0
        %747 = vmatpush1.bf16.xpose.msra.mxu0 0
        %748 = vmatprep.subr.bf16.mxu0 0
        %749 = vmatpush1.bf16.xpose.msra.mxu0 0
        %750 = vmatprep.subr.bf16.mxu0 0
        %751 = vmatpush1.bf16.xpose.msra.mxu0 0
        %752 = vmatprep.subr.bf16.mxu0 0
        %753 = vmatpush1.bf16.xpose.msra.mxu0 0
        %754 = vmatprep.subr.bf16.mxu0 0
        %755 = vmatpush1.bf16.xpose.msra.mxu0 0
        %756 = vmatprep.subr.bf16.mxu0 0
        %757 = vmatpush1.bf16.xpose.msra.mxu0 0
        %758 = vmatprep.subr.bf16.mxu0 0
        %759 = vmatpush1.bf16.xpose.msra.mxu0 0
        %760 = vmatprep.subr.bf16.mxu0 0
        %761 = vmatpush1.bf16.xpose.msra.mxu0 %v744
        %762 = vmatprep.subr.bf16.mxu0 0
        %763 = vmatpush2.bf16.xpose.msra.mxu0 0
        %764 = vmatprep.subr.bf16.mxu0 0
        %765 = vmatpush2.bf16.xpose.msra.mxu0 0
        %766 = vmatprep.subr.bf16.mxu0 0
        %767 = vmatpush2.bf16.xpose.msra.mxu0 0
        %768 = vmatprep.subr.bf16.mxu0 0
        %769 = vmatpush2.bf16.xpose.msra.mxu0 0
        %770 = vmatprep.subr.bf16.mxu0 0
        %771 = vmatpush2.bf16.xpose.msra.mxu0 0
        %772 = vmatprep.subr.bf16.mxu0 0
        %773 = vmatpush2.bf16.xpose.msra.mxu0 0
        %774 = vmatprep.subr.bf16.mxu0 0
        %775 = vmatpush2.bf16.xpose.msra.mxu0 0
        %776 = vmatprep.subr.bf16.mxu0 0
        %777 = vmatpush2.bf16.xpose.msra.mxu0 0
        %778 = vmatprep.mubr.bf16.mxu0 0
        %779 = vmatmul.mubr.bf16.gmra.mxu0 %v741
        %v780 = vpop.f32.mrf.mxu0
        %v781 = vadd.f32 %v542, %v780
        %v782 = vpop.f32.mrf.mxu0
        %v783 = vpop.f32.mrf.mxu0
        %v784 = vadd.f32 %v543, %v783
        %v785 = vpop.f32.mrf.mxu0
        %786 = vdwg.mxu0
        %v787 = vsel %vm665, %v781, -inf
        %788 = vmax.xlane.f32.xlu0 %v787
        %v789 = vpop.xlane.xlu0 %788
        %v790 = vsel %vm665, %v784, -inf
        %791 = vmax.xlane.f32.xlu0 %v790
        %v792 = vpop.xlane.xlu0 %791
        %v793 = vsub.f32 %v781, %v789
        %v794 = vsub.f32 %v784, %v792
        %v795 = vmul.f32 %v793, 1.442695
        %v796 = vpow.pop %v795
        %v797 = vmul.f32 %v794, 1.442695
        %v798 = vpow.pop %v797
        %v799 = vsel %vm665, %v796, 0.0
        %800 = vadd.xlane.f32.xlu0 %v799
        %v801 = vpop.xlane.xlu0 %800
        %v802 = vsel %vm665, %v798, 0.0
        %803 = vadd.xlane.f32.xlu0 %v802
        %v804 = vpop.xlane.xlu0 %803
        %v805 = vrcp.pop %v801
        %v806 = vrcp.pop %v804
        %v807 = vmul.f32 %v796, %v805
        %v808 = vmul.f32 %v798, %v806
        %v809 = vpack.c.bf16 %v808, %v807
        %810 = vrot.lane.b32.xlu0 %v613, 56
        %v811 = vpop.permute.xlu0 %810
        %v814 = vsel %vm665, %v809, 0
        %816 = vmatprep.subr.bf16.mxu0 0
        %817 = vmatpush1.bf16.msra.mxu0 0
        %818 = vmatprep.subr.bf16.mxu0 0
        %819 = vmatpush1.bf16.msra.mxu0 0
        %820 = vmatprep.subr.bf16.mxu0 0
        %821 = vmatpush1.bf16.msra.mxu0 0
        %822 = vmatprep.subr.bf16.mxu0 0
        %823 = vmatpush1.bf16.msra.mxu0 0
        %824 = vmatprep.subr.bf16.mxu0 0
        %825 = vmatpush1.bf16.msra.mxu0 0
        %826 = vmatprep.subr.bf16.mxu0 0
        %827 = vmatpush1.bf16.msra.mxu0 0
        %828 = vmatprep.subr.bf16.mxu0 0
        %829 = vmatpush1.bf16.msra.mxu0 0
        %830 = vmatprep.subr.bf16.mxu0 0
        %831 = vmatpush1.bf16.msra.mxu0 %v811
        %832 = vmatprep.subr.bf16.mxu0 0
        %833 = vmatpush2.bf16.msra.mxu0 0
        %834 = vmatprep.subr.bf16.mxu0 0
        %835 = vmatpush2.bf16.msra.mxu0 0
        %836 = vmatprep.subr.bf16.mxu0 0
        %837 = vmatpush2.bf16.msra.mxu0 0
        %838 = vmatprep.subr.bf16.mxu0 0
        %839 = vmatpush2.bf16.msra.mxu0 0
        %840 = vmatprep.subr.bf16.mxu0 0
        %841 = vmatpush2.bf16.msra.mxu0 0
        %842 = vmatprep.subr.bf16.mxu0 0
        %843 = vmatpush2.bf16.msra.mxu0 0
        %844 = vmatprep.subr.bf16.mxu0 0
        %845 = vmatpush2.bf16.msra.mxu0 0
        %846 = vmatprep.subr.bf16.mxu0 0
        %847 = vmatpush2.bf16.msra.mxu0 0
        %848 = vmatprep.mubr.bf16.mxu0 0
        %849 = vmatmul.mubr.bf16.gmra.mxu0 %v814
        %v850 = vpop.f32.mrf.mxu0
        %v851 = vadd.f32 0.0, %v850
        %v852 = vpop.f32.mrf.mxu0
        %v853 = vpop.f32.mrf.mxu0
        %v854 = vadd.f32 0.0, %v853
        %v855 = vpop.f32.mrf.mxu0
        %856 = vdwg.mxu0
        %857 = vrot.lane.b32.xlu0 %v613, 112
        %v858 = vpop.permute.xlu0 %857
        %859 = vrot.lane.b32.xlu0 %v613, 80
        %v860 = vpop.permute.xlu0 %859
        %v862 = vsel %vm617, %v858, 0
        %v865 = vsel %vm617, %v860, 0
        %867 = vmatprep.subr.bf16.mxu0 0
        %868 = vmatpush1.bf16.xpose.msra.mxu0 0
        %869 = vmatprep.subr.bf16.mxu0 0
        %870 = vmatpush1.bf16.xpose.msra.mxu0 0
        %871 = vmatprep.subr.bf16.mxu0 0
        %872 = vmatpush1.bf16.xpose.msra.mxu0 0
        %873 = vmatprep.subr.bf16.mxu0 0
        %874 = vmatpush1.bf16.xpose.msra.mxu0 0
        %875 = vmatprep.subr.bf16.mxu0 0
        %876 = vmatpush1.bf16.xpose.msra.mxu0 0
        %877 = vmatprep.subr.bf16.mxu0 0
        %878 = vmatpush1.bf16.xpose.msra.mxu0 0
        %879 = vmatprep.subr.bf16.mxu0 0
        %880 = vmatpush1.bf16.xpose.msra.mxu0 0
        %881 = vmatprep.subr.bf16.mxu0 0
        %882 = vmatpush1.bf16.xpose.msra.mxu0 %v865
        %883 = vmatprep.subr.bf16.mxu0 0
        %884 = vmatpush2.bf16.xpose.msra.mxu0 0
        %885 = vmatprep.subr.bf16.mxu0 0
        %886 = vmatpush2.bf16.xpose.msra.mxu0 0
        %887 = vmatprep.subr.bf16.mxu0 0
        %888 = vmatpush2.bf16.xpose.msra.mxu0 0
        %889 = vmatprep.subr.bf16.mxu0 0
        %890 = vmatpush2.bf16.xpose.msra.mxu0 0
        %891 = vmatprep.subr.bf16.mxu0 0
        %892 = vmatpush2.bf16.xpose.msra.mxu0 0
        %893 = vmatprep.subr.bf16.mxu0 0
        %894 = vmatpush2.bf16.xpose.msra.mxu0 0
        %895 = vmatprep.subr.bf16.mxu0 0
        %896 = vmatpush2.bf16.xpose.msra.mxu0 0
        %897 = vmatprep.subr.bf16.mxu0 0
        %898 = vmatpush2.bf16.xpose.msra.mxu0 0
        %899 = vmatprep.mubr.bf16.mxu0 0
        %900 = vmatmul.mubr.bf16.gmra.mxu0 %v862
        %v901 = vpop.f32.mrf.mxu0
        %v902 = vadd.f32 %v542, %v901
        %v903 = vpop.f32.mrf.mxu0
        %v904 = vpop.f32.mrf.mxu0
        %v905 = vadd.f32 %v543, %v904
        %v906 = vpop.f32.mrf.mxu0
        %907 = vdwg.mxu0
        %v908 = vsel %vm665, %v902, -inf
        %909 = vmax.xlane.f32.xlu0 %v908
        %v910 = vpop.xlane.xlu0 %909
        %v911 = vsel %vm665, %v905, -inf
        %912 = vmax.xlane.f32.xlu0 %v911
        %v913 = vpop.xlane.xlu0 %912
        %v914 = vsub.f32 %v902, %v910
        %v915 = vsub.f32 %v905, %v913
        %v916 = vmul.f32 %v914, 1.442695
        %v917 = vpow.pop %v916
        %v918 = vmul.f32 %v915, 1.442695
        %v919 = vpow.pop %v918
        %v920 = vsel %vm665, %v917, 0.0
        %921 = vadd.xlane.f32.xlu0 %v920
        %v922 = vpop.xlane.xlu0 %921
        %v923 = vsel %vm665, %v919, 0.0
        %924 = vadd.xlane.f32.xlu0 %v923
        %v925 = vpop.xlane.xlu0 %924
        %v926 = vrcp.pop %v922
        %v927 = vrcp.pop %v925
        %v928 = vmul.f32 %v917, %v926
        %v929 = vmul.f32 %v919, %v927
        %v930 = vpack.c.bf16 %v929, %v928
        %931 = vrot.lane.b32.xlu0 %v613, 48
        %v932 = vpop.permute.xlu0 %931
        %v935 = vsel %vm665, %v930, 0
        %937 = vmatprep.subr.bf16.mxu0 0
        %938 = vmatpush1.bf16.msra.mxu0 0
        %939 = vmatprep.subr.bf16.mxu0 0
        %940 = vmatpush1.bf16.msra.mxu0 0
        %941 = vmatprep.subr.bf16.mxu0 0
        %942 = vmatpush1.bf16.msra.mxu0 0
        %943 = vmatprep.subr.bf16.mxu0 0
        %944 = vmatpush1.bf16.msra.mxu0 0
        %945 = vmatprep.subr.bf16.mxu0 0
        %946 = vmatpush1.bf16.msra.mxu0 0
        %947 = vmatprep.subr.bf16.mxu0 0
        %948 = vmatpush1.bf16.msra.mxu0 0
        %949 = vmatprep.subr.bf16.mxu0 0
        %950 = vmatpush1.bf16.msra.mxu0 0
        %951 = vmatprep.subr.bf16.mxu0 0
        %952 = vmatpush1.bf16.msra.mxu0 %v932
        %953 = vmatprep.subr.bf16.mxu0 0
        %954 = vmatpush2.bf16.msra.mxu0 0
        %955 = vmatprep.subr.bf16.mxu0 0
        %956 = vmatpush2.bf16.msra.mxu0 0
        %957 = vmatprep.subr.bf16.mxu0 0
        %958 = vmatpush2.bf16.msra.mxu0 0
        %959 = vmatprep.subr.bf16.mxu0 0
        %960 = vmatpush2.bf16.msra.mxu0 0
        %961 = vmatprep.subr.bf16.mxu0 0
        %962 = vmatpush2.bf16.msra.mxu0 0
        %963 = vmatprep.subr.bf16.mxu0 0
        %964 = vmatpush2.bf16.msra.mxu0 0
        %965 = vmatprep.subr.bf16.mxu0 0
        %966 = vmatpush2.bf16.msra.mxu0 0
        %967 = vmatprep.subr.bf16.mxu0 0
        %968 = vmatpush2.bf16.msra.mxu0 0
        %969 = vmatprep.mubr.bf16.mxu0 0
        %970 = vmatmul.mubr.bf16.gmra.mxu0 %v935
        %v971 = vpop.f32.mrf.mxu0
        %v972 = vadd.f32 0.0, %v971
        %v973 = vpop.f32.mrf.mxu0
        %v974 = vpop.f32.mrf.mxu0
        %v975 = vadd.f32 0.0, %v974
        %v976 = vpop.f32.mrf.mxu0
        %977 = vdwg.mxu0
        %978 = vrot.lane.b32.xlu0 %v613, 104
        %v979 = vpop.permute.xlu0 %978
        %980 = vrot.lane.b32.xlu0 %v613, 72
        %v981 = vpop.permute.xlu0 %980
        %v983 = vsel %vm617, %v979, 0
        %v986 = vsel %vm617, %v981, 0
        %988 = vmatprep.subr.bf16.mxu0 0
        %989 = vmatpush1.bf16.xpose.msra.mxu0 0
        %990 = vmatprep.subr.bf16.mxu0 0
        %991 = vmatpush1.bf16.xpose.msra.mxu0 0
        %992 = vmatprep.subr.bf16.mxu0 0
        %993 = vmatpush1.bf16.xpose.msra.mxu0 0
        %994 = vmatprep.subr.bf16.mxu0 0
        %995 = vmatpush1.bf16.xpose.msra.mxu0 0
        %996 = vmatprep.subr.bf16.mxu0 0
        %997 = vmatpush1.bf16.xpose.msra.mxu0 0
        %998 = vmatprep.subr.bf16.mxu0 0
        %999 = vmatpush1.bf16.xpose.msra.mxu0 0
        %1000 = vmatprep.subr.bf16.mxu0 0
        %1001 = vmatpush1.bf16.xpose.msra.mxu0 0
        %1002 = vmatprep.subr.bf16.mxu0 0
        %1003 = vmatpush1.bf16.xpose.msra.mxu0 %v986
        %1004 = vmatprep.subr.bf16.mxu0 0
        %1005 = vmatpush2.bf16.xpose.msra.mxu0 0
        %1006 = vmatprep.subr.bf16.mxu0 0
        %1007 = vmatpush2.bf16.xpose.msra.mxu0 0
        %1008 = vmatprep.subr.bf16.mxu0 0
        %1009 = vmatpush2.bf16.xpose.msra.mxu0 0
        %1010 = vmatprep.subr.bf16.mxu0 0
        %1011 = vmatpush2.bf16.xpose.msra.mxu0 0
        %1012 = vmatprep.subr.bf16.mxu0 0
        %1013 = vmatpush2.bf16.xpose.msra.mxu0 0
        %1014 = vmatprep.subr.bf16.mxu0 0
        %1015 = vmatpush2.bf16.xpose.msra.mxu0 0
        %1016 = vmatprep.subr.bf16.mxu0 0
        %1017 = vmatpush2.bf16.xpose.msra.mxu0 0
        %1018 = vmatprep.subr.bf16.mxu0 0
        %1019 = vmatpush2.bf16.xpose.msra.mxu0 0
        %1020 = vmatprep.mubr.bf16.mxu0 0
        %1021 = vmatmul.mubr.bf16.gmra.mxu0 %v983
        %v1022 = vpop.f32.mrf.mxu0
        %v1023 = vadd.f32 %v542, %v1022
        %v1024 = vpop.f32.mrf.mxu0
        %v1025 = vpop.f32.mrf.mxu0
        %v1026 = vadd.f32 %v543, %v1025
        %v1027 = vpop.f32.mrf.mxu0
        %1028 = vdwg.mxu0
        %v1029 = vsel %vm665, %v1023, -inf
        %1030 = vmax.xlane.f32.xlu0 %v1029
        %v1031 = vpop.xlane.xlu0 %1030
        %v1032 = vsel %vm665, %v1026, -inf
        %1033 = vmax.xlane.f32.xlu0 %v1032
        %v1034 = vpop.xlane.xlu0 %1033
        %v1035 = vsub.f32 %v1023, %v1031
        %v1036 = vsub.f32 %v1026, %v1034
        %v1037 = vmul.f32 %v1035, 1.442695
        %v1038 = vpow.pop %v1037
        %v1039 = vmul.f32 %v1036, 1.442695
        %v1040 = vpow.pop %v1039
        %v1041 = vsel %vm665, %v1038, 0.0
        %1042 = vadd.xlane.f32.xlu0 %v1041
        %v1043 = vpop.xlane.xlu0 %1042
        %v1044 = vsel %vm665, %v1040, 0.0
        %1045 = vadd.xlane.f32.xlu0 %v1044
        %v1046 = vpop.xlane.xlu0 %1045
        %v1047 = vrcp.pop %v1043
        %v1048 = vrcp.pop %v1046
        %v1049 = vmul.f32 %v1038, %v1047
        %v1050 = vmul.f32 %v1040, %v1048
        %v1051 = vpack.c.bf16 %v1050, %v1049
        %1052 = vrot.lane.b32.xlu0 %v613, 40
        %v1053 = vpop.permute.xlu0 %1052
        %v1056 = vsel %vm665, %v1051, 0
        %1058 = vmatprep.subr.bf16.mxu0 0
        %1059 = vmatpush1.bf16.msra.mxu0 0
        %1060 = vmatprep.subr.bf16.mxu0 0
        %1061 = vmatpush1.bf16.msra.mxu0 0
        %1062 = vmatprep.subr.bf16.mxu0 0
        %1063 = vmatpush1.bf16.msra.mxu0 0
        %1064 = vmatprep.subr.bf16.mxu0 0
        %1065 = vmatpush1.bf16.msra.mxu0 0
        %1066 = vmatprep.subr.bf16.mxu0 0
        %1067 = vmatpush1.bf16.msra.mxu0 0
        %1068 = vmatprep.subr.bf16.mxu0 0
        %1069 = vmatpush1.bf16.msra.mxu0 0
        %1070 = vmatprep.subr.bf16.mxu0 0
        %1071 = vmatpush1.bf16.msra.mxu0 0
        %1072 = vmatprep.subr.bf16.mxu0 0
        %1073 = vmatpush1.bf16.msra.mxu0 %v1053
        %1074 = vmatprep.subr.bf16.mxu0 0
        %1075 = vmatpush2.bf16.msra.mxu0 0
        %1076 = vmatprep.subr.bf16.mxu0 0
        %1077 = vmatpush2.bf16.msra.mxu0 0
        %1078 = vmatprep.subr.bf16.mxu0 0
        %1079 = vmatpush2.bf16.msra.mxu0 0
        %1080 = vmatprep.subr.bf16.mxu0 0
        %1081 = vmatpush2.bf16.msra.mxu0 0
        %1082 = vmatprep.subr.bf16.mxu0 0
        %1083 = vmatpush2.bf16.msra.mxu0 0
        %1084 = vmatprep.subr.bf16.mxu0 0
        %1085 = vmatpush2.bf16.msra.mxu0 0
        %1086 = vmatprep.subr.bf16.mxu0 0
        %1087 = vmatpush2.bf16.msra.mxu0 0
        %1088 = vmatprep.subr.bf16.mxu0 0
        %1089 = vmatpush2.bf16.msra.mxu0 0
        %1090 = vmatprep.mubr.bf16.mxu0 0
        %1091 = vmatmul.mubr.bf16.gmra.mxu0 %v1056
        %v1092 = vpop.f32.mrf.mxu0
        %v1093 = vadd.f32 0.0, %v1092
        %v1094 = vpop.f32.mrf.mxu0
        %v1095 = vpop.f32.mrf.mxu0
        %v1096 = vadd.f32 0.0, %v1095
        %v1097 = vpop.f32.mrf.mxu0
        %1098 = vdwg.mxu0
        %1101 = vrot.lane.b32.xlu0 %v851, 8
        %v1102 = vpop.permute.xlu0 %1101
        %1103 = vrot.lane.b32.xlu0 %v854, 8
        %v1104 = vpop.permute.xlu0 %1103
        %1109 = vrot.lane.b32.xlu0 %v972, 16
        %v1110 = vpop.permute.xlu0 %1109
        %1111 = vrot.lane.b32.xlu0 %v975, 16
        %v1112 = vpop.permute.xlu0 %1111
        %1117 = vrot.lane.b32.xlu0 %v1093, 24
        %v1118 = vpop.permute.xlu0 %1117
        %1119 = vrot.lane.b32.xlu0 %v1096, 24
        %v1120 = vpop.permute.xlu0 %1119
        %v1123 = vsel %vm617, %v730, %v1102
        %v1124 = vsel %vm617, %v733, %v1104
        %v1125 = vsel %vm665, %v1123, %v1110
        %v1126 = vsel %vm665, %v1124, %v1112
        %vm1127 = vcmask 195584
        %v1128 = vsel %vm1127, %v1125, %v1118
        %v1129 = vsel %vm1127, %v1126, %v1120
        %v1130 = vpack.c.bf16 %v1129, %v1128
        %v1131 = vld [vmem:[%s467] sm:$0xf]
        %v1132 = vld [vmem:[%s467 + $0x4] sm:$0xf]
        %v1133 = vld [vmem:[%s467 + $0x8] sm:$0xf]
        %v1134 = vld [vmem:[%s467 + $0xc] sm:$0xf]
        %v1135 = vld [vmem:[%s470] sm:$0x1]
        %v1137 = vlaneseq
        %v1138 = vshrl.u32 %v1137, 7
        %v1139 = vsub.s32 0, %v1138
        %v1140 = vrot.slane %v1135, %v1139
        %v1146 = vunpack.c.l.b16 %v1131
        %v1147 = vunpack.c.l.b16 %v1132
        %v1148 = vunpack.c.l.b16 %v1133
        %v1149 = vunpack.c.l.b16 %v1134
        %v1150 = vpack.c.b16 %v1147, %v1146
        %v1151 = vpack.c.b16 %v1149, %v1148
        %v1155 = vsel %vm568, %v1130, 0
        %1157 = vmatprep.subr.bf16.mxu0 0
        %1158 = vmatpush1.bf16.msra.mxu0 0
        %1159 = vmatprep.subr.bf16.mxu0 0
        %1160 = vmatpush1.bf16.msra.mxu0 0
        %1161 = vmatprep.subr.bf16.mxu0 0
        %1162 = vmatpush1.bf16.msra.mxu0 0
        %1163 = vmatprep.subr.bf16.mxu0 0
        %1164 = vmatpush1.bf16.msra.mxu0 0
        %1165 = vmatprep.subr.bf16.mxu0 0
        %1166 = vmatpush1.bf16.msra.mxu0 0
        %1167 = vmatprep.subr.bf16.mxu0 0
        %1168 = vmatpush1.bf16.msra.mxu0 0
        %1169 = vmatprep.subr.bf16.mxu0 0
        %1170 = vmatpush1.bf16.msra.mxu0 %v1151
        %1171 = vmatprep.subr.bf16.mxu0 0
        %1172 = vmatpush1.bf16.msra.mxu0 %v1150
        %1173 = vmatprep.subr.bf16.mxu0 0
        %1174 = vmatpush2.bf16.msra.mxu0 0
        %1175 = vmatprep.subr.bf16.mxu0 0
        %1176 = vmatpush2.bf16.msra.mxu0 0
        %1177 = vmatprep.subr.bf16.mxu0 0
        %1178 = vmatpush2.bf16.msra.mxu0 0
        %1179 = vmatprep.subr.bf16.mxu0 0
        %1180 = vmatpush2.bf16.msra.mxu0 0
        %1181 = vmatprep.subr.bf16.mxu0 0
        %1182 = vmatpush2.bf16.msra.mxu0 0
        %1183 = vmatprep.subr.bf16.mxu0 0
        %1184 = vmatpush2.bf16.msra.mxu0 0
        %1185 = vmatprep.subr.bf16.mxu0 0
        %1186 = vmatpush2.bf16.msra.mxu0 0
        %1187 = vmatprep.subr.bf16.mxu0 0
        %1188 = vmatpush2.bf16.msra.mxu0 0
        %1189 = vmatprep.mubr.bf16.mxu0 0
        %1190 = vmatmul.mubr.bf16.gmra.mxu0 %v1155
        %v1191 = vpop.f32.mrf.mxu0
        %v1192 = vadd.f32 %v1140, %v1191
        %v1193 = vpop.f32.mrf.mxu0
        %v1194 = vpop.f32.mrf.mxu0
        %v1195 = vadd.f32 %v1140, %v1194
        %v1196 = vpop.f32.mrf.mxu0
        %1197 = vdwg.mxu0
        %v1198 = vadd.f32 %v497, %v1192
        %v1199 = vadd.f32 %v498, %v1195
        %v1200 = vsel %vm568, %v1198, 0.0
        %1201 = vadd.xlane.f32.xlu0 %v1200
        %v1202 = vpop.xlane.xlu0 %1201
        %v1203 = vsel %vm568, %v1199, 0.0
        %1204 = vadd.xlane.f32.xlu0 %v1203
        %v1205 = vpop.xlane.xlu0 %1204
        %v1206 = vrcp.pop 32.0
        %v1207 = vmul.f32 %v1202, %v1206
        %v1208 = vmul.f32 %v1205, %v1206
        %v1209 = vsub.f32 %v1198, %v1207
        %v1210 = vsub.f32 %v1199, %v1208
        %v1211 = vmul.f32 %v1209, %v1209
        %v1212 = vmul.f32 %v1210, %v1210
        %v1213 = vsel %vm568, %v1211, 0.0
        %1214 = vadd.xlane.f32.xlu0 %v1213
        %v1215 = vpop.xlane.xlu0 %1214
        %v1216 = vsel %vm568, %v1212, 0.0
        %1217 = vadd.xlane.f32.xlu0 %v1216
        %v1218 = vpop.xlane.xlu0 %1217
        %v1219 = vmul.f32 %v1215, %v1206
        %v1220 = vmul.f32 %v1218, %v1206
        %v1221 = vadd.f32 %v1219, 32.0
        %v1222 = vadd.f32 %v1220, 32.0
        %v1223 = vrsqrt.pop %v1221
        %v1224 = vrsqrt.pop %v1222
        %v1225 = vmul.f32 %v1209, %v1223
        %v1226 = vmul.f32 %v1210, %v1224
        %v1227 = vpack.c.bf16 %v1226, %v1225
        %v1228 = vld [vmem:[%s475] sm:$0xf]
        %v1229 = vld [vmem:[%s475 + $0x4] sm:$0xf]
        %v1230 = vld [vmem:[%s475 + $0x8] sm:$0xf]
        %v1231 = vld [vmem:[%s475 + $0xc] sm:$0xf]
        %v1232 = vld [vmem:[%s478] sm:$0x1]
        %v1234 = vlaneseq
        %v1235 = vshrl.u32 %v1234, 7
        %v1236 = vsub.s32 0, %v1235
        %v1237 = vrot.slane %v1232, %v1236
        %v1243 = vunpack.c.l.b16 %v1228
        %v1244 = vunpack.c.l.b16 %v1229
        %v1245 = vunpack.c.l.b16 %v1230
        %v1246 = vunpack.c.l.b16 %v1231
        %v1247 = vpack.c.b16 %v1244, %v1243
        %v1248 = vpack.c.b16 %v1246, %v1245
        %v1252 = vsel %vm568, %v1227, 0
        %1254 = vmatprep.subr.bf16.mxu0 0
        %1255 = vmatpush1.bf16.msra.mxu0 0
        %1256 = vmatprep.subr.bf16.mxu0 0
        %1257 = vmatpush1.bf16.msra.mxu0 0
        %1258 = vmatprep.subr.bf16.mxu0 0
        %1259 = vmatpush1.bf16.msra.mxu0 0
        %1260 = vmatprep.subr.bf16.mxu0 0
        %1261 = vmatpush1.bf16.msra.mxu0 0
        %1262 = vmatprep.subr.bf16.mxu0 0
        %1263 = vmatpush1.bf16.msra.mxu0 0
        %1264 = vmatprep.subr.bf16.mxu0 0
        %1265 = vmatpush1.bf16.msra.mxu0 0
        %1266 = vmatprep.subr.bf16.mxu0 0
        %1267 = vmatpush1.bf16.msra.mxu0 %v1248
        %1268 = vmatprep.subr.bf16.mxu0 0
        %1269 = vmatpush1.bf16.msra.mxu0 %v1247
        %1270 = vmatprep.subr.bf16.mxu0 0
        %1271 = vmatpush2.bf16.msra.mxu0 0
        %1272 = vmatprep.subr.bf16.mxu0 0
        %1273 = vmatpush2.bf16.msra.mxu0 0
        %1274 = vmatprep.subr.bf16.mxu0 0
        %1275 = vmatpush2.bf16.msra.mxu0 0
        %1276 = vmatprep.subr.bf16.mxu0 0
        %1277 = vmatpush2.bf16.msra.mxu0 0
        %1278 = vmatprep.subr.bf16.mxu0 0
        %1279 = vmatpush2.bf16.msra.mxu0 0
        %1280 = vmatprep.subr.bf16.mxu0 0
        %1281 = vmatpush2.bf16.msra.mxu0 0
        %1282 = vmatprep.subr.bf16.mxu0 0
        %1283 = vmatpush2.bf16.msra.mxu0 0
        %1284 = vmatprep.subr.bf16.mxu0 0
        %1285 = vmatpush2.bf16.msra.mxu0 0
        %1286 = vmatprep.mubr.bf16.mxu0 0
        %1287 = vmatmul.mubr.bf16.gmra.mxu0 %v1252
        %v1288 = vpop.f32.mrf.mxu0
        %v1289 = vadd.f32 %v1237, %v1288
        %v1290 = vpop.f32.mrf.mxu0
        %v1291 = vpop.f32.mrf.mxu0
        %v1292 = vadd.f32 %v1237, %v1291
        %v1293 = vpop.f32.mrf.mxu0
        %1294 = vdwg.mxu0
        %v1295 = vmax.f32 %v1289, 0.0
        %v1296 = vmax.f32 %v1292, 0.0
        %v1297 = vpack.c.bf16 %v1296, %v1295
        %v1298 = vld [vmem:[%s483] sm:$0xf]
        %v1299 = vld [vmem:[%s483 + $0x4] sm:$0xf]
        %v1300 = vld [vmem:[%s483 + $0x8] sm:$0xf]
        %v1301 = vld [vmem:[%s483 + $0xc] sm:$0xf]
        %v1302 = vld [vmem:[%s483 + $0x10] sm:$0xf]
        %v1303 = vld [vmem:[%s483 + $0x14] sm:$0xf]
        %v1304 = vld [vmem:[%s483 + $0x18] sm:$0xf]
        %v1305 = vld [vmem:[%s483 + $0x1c] sm:$0xf]
        %v1306 = vld [vmem:[%s486] sm:$0x1]
        %v1308 = vlaneseq
        %v1309 = vshrl.u32 %v1308, 7
        %v1310 = vsub.s32 0, %v1309
        %v1311 = vrot.slane %v1306, %v1310
        %v1321 = vunpack.c.l.b16 %v1298
        %v1322 = vunpack.c.l.b16 %v1299
        %v1323 = vunpack.c.l.b16 %v1300
        %v1324 = vunpack.c.l.b16 %v1301
        %v1325 = vunpack.c.l.b16 %v1302
        %v1326 = vunpack.c.l.b16 %v1303
        %v1327 = vunpack.c.l.b16 %v1304
        %v1328 = vunpack.c.l.b16 %v1305
        %v1329 = vpack.c.b16 %v1322, %v1321
        %v1330 = vpack.c.b16 %v1324, %v1323
        %v1331 = vpack.c.b16 %v1326, %v1325
        %v1332 = vpack.c.b16 %v1328, %v1327
        %vm1337 = vcmask 523264
        %v1339 = vsel %vm1337, %v1297, 0
        %1341 = vmatprep.subr.bf16.mxu0 0
        %1342 = vmatpush1.bf16.msra.mxu0 0
        %1343 = vmatprep.subr.bf16.mxu0 0
        %1344 = vmatpush1.bf16.msra.mxu0 0
        %1345 = vmatprep.subr.bf16.mxu0 0
        %1346 = vmatpush1.bf16.msra.mxu0 0
        %1347 = vmatprep.subr.bf16.mxu0 0
        %1348 = vmatpush1.bf16.msra.mxu0 0
        %1349 = vmatprep.subr.bf16.mxu0 0
        %1350 = vmatpush1.bf16.msra.mxu0 %v1332
        %1351 = vmatprep.subr.bf16.mxu0 0
        %1352 = vmatpush1.bf16.msra.mxu0 %v1331
        %1353 = vmatprep.subr.bf16.mxu0 0
        %1354 = vmatpush1.bf16.msra.mxu0 %v1330
        %1355 = vmatprep.subr.bf16.mxu0 0
        %1356 = vmatpush1.bf16.msra.mxu0 %v1329
        %1357 = vmatprep.subr.bf16.mxu0 0
        %1358 = vmatpush2.bf16.msra.mxu0 0
        %1359 = vmatprep.subr.bf16.mxu0 0
        %1360 = vmatpush2.bf16.msra.mxu0 0
        %1361 = vmatprep.subr.bf16.mxu0 0
        %1362 = vmatpush2.bf16.msra.mxu0 0
        %1363 = vmatprep.subr.bf16.mxu0 0
        %1364 = vmatpush2.bf16.msra.mxu0 0
        %1365 = vmatprep.subr.bf16.mxu0 0
        %1366 = vmatpush2.bf16.msra.mxu0 0
        %1367 = vmatprep.subr.bf16.mxu0 0
        %1368 = vmatpush2.bf16.msra.mxu0 0
        %1369 = vmatprep.subr.bf16.mxu0 0
        %1370 = vmatpush2.bf16.msra.mxu0 0
        %1371 = vmatprep.subr.bf16.mxu0 0
        %1372 = vmatpush2.bf16.msra.mxu0 0
        %1373 = vmatprep.mubr.bf16.mxu0 0
        %1374 = vmatmul.mubr.bf16.gmra.mxu0 %v1339
        %v1375 = vpop.f32.mrf.mxu0
        %v1376 = vadd.f32 %v1311, %v1375
        %v1377 = vpop.f32.mrf.mxu0
        %v1378 = vpop.f32.mrf.mxu0
        %v1379 = vadd.f32 %v1311, %v1378
        %v1380 = vpop.f32.mrf.mxu0
        %1381 = vdwg.mxu0
        %1382 = vst.msk [vmem:[#allocation2] sm:$0xff] %vm568, %v1376
        %1383 = vst.msk [vmem:[#allocation2 + $0x8] sm:$0xff] %vm568, %v1379
        %vm1384 = vcmp.eq.s32.totalorder %v500, %v503
        %vm1385 = vcmp.eq.s32.totalorder %v501, %v503
        %v1386 = vsel %vm1384, %v1219, 0.0
        %v1387 = vsel %vm1385, %v1220, 0.0
        %v1388 = vsel %vm665, %v1386, 0.0
        %v1389 = vsel %vm665, %v1387, 0.0
        %v1390 = vadd.f32 %v1388, %v1389
        %v1391 = vrot.slane %v1390, 4
        %v1392 = vadd.f32 %v1390, %v1391
        %v1393 = vrot.slane %v1392, 2
        %v1394 = vadd.f32 %v1392, %v1393
        %v1395 = vrot.slane %v1394, 1
        %v1396 = vadd.f32 %v1394, %v1395
        %vm1397 = vcmask 122880
        %1398 = vst.msk [vmem:[%s454] sm:$0x1] %vm1397, %v1396
        %p1399 = scmp.eq.s32.totalorder %s27, 1
        // Predicated region
        $region65: #{tpu_custom_call.1} parent=55 // pred_check
          %p1400 = pneg %p1399
        $region66: #{tpu_custom_call.1} parent=55 // pred_check_branch
          %1402 = sbr.rel (%p1400) target = $region68
        $region67: #{tpu_custom_call.1} parent=55 // pred_region
          %1403 = vst.msk [vmem:[#allocation6] sm:$0xff] %vm568, %v1376
          %1404 = vst.msk [vmem:[#allocation6 + $0x8] sm:$0xff] %vm568, %v1379
        $region68: #{tpu_custom_call.1} parent=55 // pred_fallthru
          _
        %s1405 = sand.u32 %s285, 1
        %s1406 = scalar_lea.sflag [#allocation8], %s1405
        %s1407 = sand.u32 %s285, 1
        %s1408 = scalar_lea.vmem [#allocation7], %s1407
        // Predicated region
        $region69: #{tpu_custom_call.1} parent=55 // pred_check
          %p1409 = pneg %p269
        $region70: #{tpu_custom_call.1} parent=55 // pred_check_branch
          %1411 = sbr.rel (%p1409) target = $region72
        $region71: #{tpu_custom_call.1} parent=55 // pred_region
          %s1413 = ssub.s32 256, 256
          %1414 = vsyncadd [#allocation5], %s1413
          %s1415 = sshll.u32 [#allocation6], 4
          %s1416 = int_to_ptr.vmem [resolvable:$true] %s1415
          %1421 = dma.vmem_to_hbm [thread:$0]  %s1416, 256, %s9, [#allocation5], 128, 128, 8
        $region72: #{tpu_custom_call.1} parent=55 // pred_fallthru
          _
        // Predicated region
        $region73: #{tpu_custom_call.1} parent=55 // pred_check
          %p1422 = pneg %p295
        $region74: #{tpu_custom_call.1} parent=55 // pred_check_branch
          %1424 = sbr.rel (%p1422) target = $region76
        $region75: #{tpu_custom_call.1} parent=55 // pred_region
          %s1426 = ssub.s32 16, 16
          %1427 = vsyncadd %s1406, %s1426
          %s1428 = smul.addr %s27, 16
          %s1429 = scalar_lea.hbm %s10, %s1428
          %s1431 = sshll.u32 %s1408, 4
          %s1432 = int_to_ptr.vmem [resolvable:$true] %s1431
          %1434 = dma.vmem_to_hbm [thread:$0]  %s1432, 16, %s1429, %s1406
        $region76: #{tpu_custom_call.1} parent=55 // pred_fallthru
          _
        // Predicated region
        $region77: #{tpu_custom_call.1} parent=55 // pred_check
          %p1435 = pneg %p269
        $region78: #{tpu_custom_call.1} parent=55 // pred_check_branch
          %1437 = sbr.rel (%p1435) target = $region80
        $region79: #{tpu_custom_call.1} parent=55 // pred_region
          %1438 = dma.done [#allocation5], 256
        $region80: #{tpu_custom_call.1} parent=55 // pred_fallthru
          _
      $region56: #{tpu_custom_call.1} parent=5 // pred_fallthru
        _
      %p1439 = scmp.le.s32.totalorder 2, %s22
      // Predicated region
      $region81: #{tpu_custom_call.1} parent=5 // pred_check
        %p1440 = pneg %p1439
      $region82: #{tpu_custom_call.1} parent=5 // pred_check_branch
        %1442 = sbr.rel (%p1440) target = $region84
      $region83: #{tpu_custom_call.1} parent=5 // pred_region
        %s1443 = ssub.s32 %s22, 2
        // Predicated region
        $region85: #{tpu_custom_call.1} parent=83 // pred_check
          %p1444 = pneg %p301
        $region86: #{tpu_custom_call.1} parent=83 // pred_check_branch
          %1446 = sbr.rel (%p1444) target = $region88
        $region87: #{tpu_custom_call.1} parent=83 // pred_region
          %s1447 = sand.u32 %s286, 1
          %s1448 = scalar_lea.sflag [#allocation8], %s1447
          %s1449 = sand.u32 %s286, 1
          %s1450 = scalar_lea.vmem [#allocation7], %s1449
          %1451 = dma.done %s1448, 16
        $region88: #{tpu_custom_call.1} parent=83 // pred_fallthru
          _
      $region84: #{tpu_custom_call.1} parent=5 // pred_fallthru
        _
    $region6: #{tpu_custom_call.1} parent=1 // loop_footer
      %s26 = sadd.s32 1, %s22
    $region7: #{tpu_custom_call.1} parent=1 // loop_footer_branch
      %21 = sbr.rel target = $region3
    $region8: #{tpu_custom_call.1} parent=1 // loop_exit
      _
    %1452 = vsyncpa [#allocation4], 1
    %s1453 = scalar_lea.sflag [#allocation4], 1
    %1454 = vsyncpa %s1453, 1
    %1455 = vsyncpa [#allocation5], 1
    %s1456 = scalar_lea.sflag [#allocation5], 1
    %1457 = vsyncpa %s1456, 1
    %1458 = vsyncpa [#allocation8], 1
    %s1459 = scalar_lea.sflag [#allocation8], 1
    %1460 = vsyncpa %s1459, 1

</llo_original>
